<compile_context>
chip_gen: v6e
topology: v6e:2x2x1
jax: 0.10.0
libtpu: 0.0.40
codegen_flags: <defaults>
</compile_context>

<pallas_src>
import functools

import jax
import jax.numpy as jnp
from jax import lax
from jax.experimental import pallas as pl
from jax.experimental.pallas import tpu as pltpu


def _attn_kernel(x_ref, wqk_ref, bqk_ref, o_ref, q_scr, k_scr,
                 *, G, Dh, GDh, tq, n_valid, n_pad):
    # grid = (batch b, head_group hg, q_tile qi); qi innermost.
    qi = pl.program_id(2)

    # Fused Q/K projection for all tokens, once per (batch, head-group):
    # one big 2*GDh-lane MXU matmul; results cached in VMEM scratch and
    # reused by every q-tile.
    @pl.when(qi == 0)
    def _():
        x_all = x_ref[0]                                        # (Np, C) bf16
        qk = jnp.dot(x_all, wqk_ref[0],
                     preferred_element_type=jnp.float32) + bqk_ref[0]
        q_scr[...] = qk[:, :GDh].astype(jnp.bfloat16)           # scale folded
        k_scr[...] = qk[:, GDh:].astype(jnp.bfloat16)

    row0 = pl.multiple_of(qi * tq, tq)
    q_tile = q_scr[pl.ds(row0, tq), :]                          # (tq, GDh)

    # Additive key-padding bias, hoisted out of the per-head loop (static
    # Python condition: only emitted when padding actually exists).
    if n_valid < n_pad:
        col = lax.broadcasted_iota(jnp.int32, (tq, n_pad), 1)
        key_bias = jnp.where(col < n_valid, 0.0, -1e30).astype(jnp.float32)
    else:
        key_bias = None

    # Per-head scores + softmax.  G <= 4 here, so a static unroll keeps the
    # f32 (tq, n_pad) temporaries' live set small.
    # TODO(synk): switch to lax.fori_loop with pl.ds head slicing if G > 4.
    for g in range(G):
        q_h = q_tile[:, g * Dh:(g + 1) * Dh]                    # (tq, Dh)
        k_h = k_scr[:, g * Dh:(g + 1) * Dh]                     # (n_pad, Dh)
        scores = lax.dot_general(q_h, k_h, (((1,), (1,)), ((), ())),
                                 preferred_element_type=jnp.float32)
        if key_bias is not None:
            scores = scores + key_bias
        m = jnp.max(scores, axis=-1, keepdims=True)
        e = jnp.exp(scores - m)
        inv = pl.reciprocal(jnp.sum(e, axis=-1, keepdims=True), approx=True)
        o_ref[0, g] = (e * inv).astype(o_ref.dtype)


def dinov2_last_self_attention(x, wq, bq, wk, bk, num_heads, *,
                               out_dtype=jnp.bfloat16, trim_padding=True):
    """DINOv2-style last-block self-attention maps.

    Args:
      x:  (B, N, C) token embeddings.
      wq: (C, C) query weight (applied as x @ wq), bq: (C,) bias.
      wk: (C, C) key weight,                       bk: (C,) bias.
      num_heads: H, with head_dim = C // H.

    Returns:
      (B, H, N, N) attention probabilities (out_dtype, bf16 by default).
    """
    B, N, C = x.shape
    H = num_heads
    Dh = C // H
    scale = float(Dh) ** -0.5

    # Heads per grid step: target 256-lane grouped weight/score tiles
    # (v6e/v7x MXU width).  G must divide H.
    # TODO(synk): on v5e a 128-lane target (G*Dh=128) matches its MXU width.
    G = min(H, max(1, 256 // max(Dh, 1)))
    while H % G:
        G -= 1
    NG = H // G
    GDh = G * Dh

    # Pad the token axis to a multiple of 128: lane-dense output stores,
    # 8-aligned scratch sublanes.  Padded key columns are masked in-kernel,
    # padded query rows are sliced off below.
    Np = max(128, ((N + 127) // 128) * 128)

    out_bytes = jnp.dtype(out_dtype).itemsize
    MIB = 1024 * 1024

    try:
        info = pltpu.get_tpu_info()
        vmem_cap = int(getattr(info, "vmem_capacity_bytes", 64 * MIB))
    except Exception:  # pragma: no cover - conservative (v7x-safe) fallback
        vmem_cap = 64 * MIB

    def footprint(tq):
        return (2 * G * tq * Np * out_bytes      # out tile, double-buffered
                + 2 * Np * C * 2                 # x block, double-buffered
                + 2 * C * 2 * GDh * 2            # fused q/k weights
                + 2 * Np * GDh * 2               # Q/K bf16 scratches
                + 3 * tq * Np * 4                # f32 scores/exp temporaries
                + Np * 2 * GDh * 4)              # qi==0 projection temp

    # Largest q-tile (multiple of 8, dividing Np) that fits the VMEM budget;
    # on v5e/v6e (128 MiB) this is typically the whole padded sequence, on
    # v7x (64 MiB) a fraction of it.
    budget = int(0.55 * vmem_cap)
    cands = sorted({d for d in range(8, Np + 1, 8) if Np % d == 0},
                   reverse=True)
    tq = next((t for t in cands if footprint(t) <= budget), cands[-1])
    n_qt = Np // tq

    vmem_limit = int(min(0.75 * vmem_cap,
                         max(32 * MIB, 1.4 * footprint(tq))))

    # Fold the softmax scale into the query weight/bias host-side, group
    # heads head-group-major, and fuse Q/K weights along the lane axis.
    wq_g = (wq * scale).reshape(C, NG, GDh).transpose(1, 0, 2)
    wk_g = wk.reshape(C, NG, GDh).transpose(1, 0, 2)
    wqk_g = jnp.concatenate([wq_g, wk_g], axis=-1).astype(jnp.bfloat16)
    bq_g = (bq * scale).reshape(NG, 1, GDh)
    bk_g = bk.reshape(NG, 1, GDh)
    bqk_g = jnp.concatenate([bq_g, bk_g], axis=-1).astype(jnp.float32)

    x_bf = x.astype(jnp.bfloat16)      # halve activation DMA bytes
    if Np != N:
        x_bf = jnp.pad(x_bf, ((0, 0), (0, Np - N), (0, 0)))

    kernel = functools.partial(_attn_kernel, G=G, Dh=Dh, GDh=GDh, tq=tq,
                               n_valid=N, n_pad=Np)

    flops = 4 * B * Np * C * C + 2 * B * H * Np * Np * Dh
    transcendentals = B * H * Np * Np
    bytes_accessed = (B * Np * C * 2                              # x, once per batch
                      + B * NG * (C * 2 * GDh * 2 + 2 * GDh * 4)  # weights per (b,hg)
                      + B * H * Np * Np * out_bytes)              # output

    attn = pl.pallas_call(
        kernel,
        out_shape=jax.ShapeDtypeStruct((B, H, Np, Np), out_dtype),
        grid_spec=pltpu.PrefetchScalarGridSpec(
            num_scalar_prefetch=0,
            # batch outermost -> the (1, Np, C) x block stays resident across
            # all head groups and q-tiles; q-tile innermost -> the Q/K
            # scratches computed at qi==0 are reused by later q-tiles.
            grid=(B, NG, n_qt),
            in_specs=[
                pl.BlockSpec((1, Np, C),      lambda b, hg, qi: (b, 0, 0)),   # x
                pl.BlockSpec((1, C, 2 * GDh), lambda b, hg, qi: (hg, 0, 0)),  # wqk
                pl.BlockSpec((1, 1, 2 * GDh), lambda b, hg, qi: (hg, 0, 0)),  # bqk
            ],
            out_specs=pl.BlockSpec((1, G, tq, Np),
                                   lambda b, hg, qi: (b, hg, qi, 0)),
            scratch_shapes=[pltpu.VMEM((Np, GDh), jnp.bfloat16),   # Q cache
                            pltpu.VMEM((Np, GDh), jnp.bfloat16)],  # K cache
        ),
        compiler_params=pltpu.CompilerParams(
            # b/hg independent (megacore-shardable); qi ordered so the Q/K
            # scratch computed at qi==0 stays valid for later q-tiles.
            dimension_semantics=("parallel", "parallel", "arbitrary"),
            vmem_limit_bytes=vmem_limit,
        ),
        cost_estimate=pl.CostEstimate(
            flops=flops,
            transcendentals=transcendentals,
            bytes_accessed=bytes_accessed,
        ),
    )(x_bf, wqk_g, bqk_g)

    if trim_padding and Np != N:
        attn = attn[:, :, :N, :N]
    return attn


def _reference(x, wq, bq, wk, bk, num_heads):
    B, N, C = x.shape
    H = num_heads
    Dh = C // H
    q = (x @ wq + bq).reshape(B, N, H, Dh).transpose(0, 2, 1, 3)
    k = (x @ wk + bk).reshape(B, N, H, Dh).transpose(0, 2, 1, 3)
    scores = jnp.einsum("bhqd,bhkd->bhqk", q * (Dh ** -0.5), k)
    return jax.nn.softmax(scores, axis=-1)


if __name__ == "__main__":
    # Small synthetic shapes consistent with the module's forward:
    # B=2 images, N=8 tokens (cls + registers + patches), C=32 hidden, 4 heads.
    B, N, C, H = 2, 8, 32, 4

    key = jax.random.PRNGKey(0)
    kx, kwq, kbq, kwk, kbk = jax.random.split(key, 5)

    x = jax.random.normal(kx, (B, N, C), dtype=jnp.float32)
    # Deterministic synthetic attention weights (the module loads a checkpoint;
    # here we init in-script as instructed).
    wq = jax.random.normal(kwq, (C, C), dtype=jnp.float32) * 0.05
    bq = jax.random.normal(kbq, (C,), dtype=jnp.float32) * 0.01
    wk = jax.random.normal(kwk, (C, C), dtype=jnp.float32) * 0.05
    bk = jax.random.normal(kbk, (C,), dtype=jnp.float32) * 0.01

    # TODO(synk): image preprocessing (Resize/Normalize) and the full ViT trunk
    # (patch embed, earlier transformer blocks) are host-side glue outside the
    # attention hot path and are not reproduced here.

    attn = dinov2_last_self_attention(x, wq, bq, wk, bk, num_heads=H)
    attn = jax.block_until_ready(attn)

    ref = _reference(x, wq, bq, wk, bk, num_heads=H)
    assert attn.shape == (B, H, N, N)
    # bf16 MXU operands + bf16 output + approx reciprocal -> relaxed tolerance.
    assert jnp.allclose(attn.astype(jnp.float32), ref, atol=2e-2, rtol=2e-2)
    assert jnp.allclose(attn.astype(jnp.float32).sum(-1), 1.0, atol=2e-2)

    print("KERNEL_OK")
</pallas_src>

<mosaic_0001>
module attributes {stable_mosaic.version = 11 : i64} {
  func.func @_attn_kernel(%arg0: i32, %arg1: i32, %arg2: i32, %arg3: memref<1x128x32xbf16, #tpu.memory_space<vmem>>, %arg4: memref<1x32x64xbf16, #tpu.memory_space<vmem>>, %arg5: memref<1x1x64xf32, #tpu.memory_space<vmem>>, %arg6: memref<1x4x128x128xbf16, #tpu.memory_space<vmem>>, %arg7: memref<128x32xbf16, #tpu.memory_space<vmem>>, %arg8: memref<128x32xbf16, #tpu.memory_space<vmem>>) attributes {dimension_semantics = [#tpu.dimension_semantics<parallel>, #tpu.dimension_semantics<parallel>, #tpu.dimension_semantics<arbitrary>], iteration_bounds = array<i64: 2, 1, 1>, scalar_prefetch = 0 : i64, scratch_operands = 2 : i64, tpu.core_type = #tpu.core_type<tc>, window_params = [{transform_indices = @transform_0, window_bounds = array<i64: 1, 128, 32>}, {transform_indices = @transform_1, window_bounds = array<i64: 1, 32, 64>}, {transform_indices = @transform_2, window_bounds = array<i64: 1, 1, 64>}, {transform_indices = @transform_3, window_bounds = array<i64: 1, 4, 128, 128>}]} {
    %c0_i32 = arith.constant 0 : i32
    %0 = arith.cmpi eq, %arg2, %c0_i32 : i32
    %1 = arith.extui %0 : i1 to i32
    %c0_i32_0 = arith.constant 0 : i32
    %2 = arith.cmpi ne, %1, %c0_i32_0 : i32
    scf.if %2 {
      %c0_32 = arith.constant 0 : index
      %c0_33 = arith.constant 0 : index
      %c0_34 = arith.constant 0 : index
      %85 = vector.load %arg3[%c0_32, %c0_33, %c0_34] : memref<1x128x32xbf16, #tpu.memory_space<vmem>>, vector<1x128x32xbf16>
      %86 = vector.shape_cast %85 : vector<1x128x32xbf16> to vector<128x32xbf16>
      %c0_35 = arith.constant 0 : index
      %c0_36 = arith.constant 0 : index
      %c0_37 = arith.constant 0 : index
      %87 = vector.load %arg4[%c0_35, %c0_36, %c0_37] : memref<1x32x64xbf16, #tpu.memory_space<vmem>>, vector<1x32x64xbf16>
      %88 = vector.shape_cast %87 : vector<1x32x64xbf16> to vector<32x64xbf16>
      %cst_38 = arith.constant dense<0.000000e+00> : vector<128x64xf32>
      %89 = tpu.matmul %86, %88, %cst_38 {dimension_numbers = #tpu.dot_dimension_numbers<[1], [0], [0], [1], [0, 0, 1, 1], [], []>} : vector<128x32xbf16>, vector<32x64xbf16>, vector<128x64xf32> -> vector<128x64xf32>
      %c0_39 = arith.constant 0 : index
      %c0_40 = arith.constant 0 : index
      %c0_41 = arith.constant 0 : index
      %90 = vector.load %arg5[%c0_39, %c0_40, %c0_41] : memref<1x1x64xf32, #tpu.memory_space<vmem>>, vector<1x1x64xf32>
      %91 = vector.shape_cast %90 : vector<1x1x64xf32> to vector<1x64xf32>
      %92 = vector.broadcast %91 : vector<1x64xf32> to vector<128x64xf32>
      %93 = arith.addf %89, %92 : vector<128x64xf32>
      %94 = vector.extract_strided_slice %93 {offsets = [0, 0], sizes = [128, 32], strides = [1, 1]} : vector<128x64xf32> to vector<128x32xf32>
      %95 = arith.truncf %94 : vector<128x32xf32> to vector<128x32xbf16>
      %c0_42 = arith.constant 0 : index
      %c0_43 = arith.constant 0 : index
      %96 = vector.load %arg7[%c0_42, %c0_43] : memref<128x32xbf16, #tpu.memory_space<vmem>>, vector<128x32xbf16>
      tpu.vector_store %arg7[%c0_42, %c0_43], %95 {strides = array<i32>} : memref<128x32xbf16, #tpu.memory_space<vmem>>, vector<128x32xbf16>,
      %97 = vector.extract_strided_slice %93 {offsets = [0, 32], sizes = [128, 32], strides = [1, 1]} : vector<128x64xf32> to vector<128x32xf32>
      %98 = arith.truncf %97 : vector<128x32xf32> to vector<128x32xbf16>
      %c0_44 = arith.constant 0 : index
      %c0_45 = arith.constant 0 : index
      %99 = vector.load %arg8[%c0_44, %c0_45] : memref<128x32xbf16, #tpu.memory_space<vmem>>, vector<128x32xbf16>
      tpu.vector_store %arg8[%c0_44, %c0_45], %98 {strides = array<i32>} : memref<128x32xbf16, #tpu.memory_space<vmem>>, vector<128x32xbf16>,
    } else {
    }
    %c128_i32 = arith.constant 128 : i32
    %3 = arith.muli %arg2, %c128_i32 : i32
    %4 = tpu.assume_multiple %3, 128 : i32
    %5 = arith.index_cast %4 : i32 to index
    %c0 = arith.constant 0 : index
    %6 = vector.load %arg7[%5, %c0] : memref<128x32xbf16, #tpu.memory_space<vmem>>, vector<128x32xbf16>
    %7 = tpu.iota {dimensions = array<i32: 1>} : vector<128x128xi32>
    %c8_i32 = arith.constant 8 : i32
    %8 = vector.broadcast %c8_i32 : i32 to vector<128x128xi32>
    %9 = arith.cmpi slt, %7, %8 : vector<128x128xi32>
    %cst = arith.constant 0.000000e+00 : f32
    %cst_1 = arith.constant -1.000000e+30 : f32
    %10 = vector.broadcast %cst : f32 to vector<128x128xf32>
    %11 = vector.broadcast %cst_1 : f32 to vector<128x128xf32>
    %12 = arith.select %9, %10, %11 : vector<128x128xi1>, vector<128x128xf32>
    %13 = vector.extract_strided_slice %6 {offsets = [0, 0], sizes = [128, 8], strides = [1, 1]} : vector<128x32xbf16> to vector<128x8xbf16>
    %c0_2 = arith.constant 0 : index
    %c0_3 = arith.constant 0 : index
    %14 = vector.load %arg8[%c0_2, %c0_3] : memref<128x32xbf16, #tpu.memory_space<vmem>>, vector<128x8xbf16>
    %cst_4 = arith.constant dense<0.000000e+00> : vector<128x128xf32>
    %15 = tpu.matmul %13, %14, %cst_4 {dimension_numbers = #tpu.dot_dimension_numbers<[1], [1], [0], [0], [0, 0, 1, 0], [], []>} : vector<128x8xbf16>, vector<128x8xbf16>, vector<128x128xf32> -> vector<128x128xf32>
    %16 = arith.addf %15, %12 : vector<128x128xf32>
    %cst_5 = arith.constant dense<0xFF800000> : vector<128xf32>
    %17 = vector.multi_reduction <maximumf>, %16, %cst_5 [1] : vector<128x128xf32> to vector<128xf32>
    %18 = vector.shape_cast %17 : vector<128xf32> to vector<128x1xf32>
    %19 = vector.broadcast %18 : vector<128x1xf32> to vector<128x128xf32>
    %20 = arith.subf %16, %19 : vector<128x128xf32>
    %21 = math.exp %20 : vector<128x128xf32>
    %cst_6 = arith.constant dense<0.000000e+00> : vector<128xf32>
    %22 = vector.multi_reduction <add>, %21, %cst_6 [1] : vector<128x128xf32> to vector<128xf32>
    %23 = vector.shape_cast %22 : vector<128xf32> to vector<128x1xf32>
    %24 = tpu.reciprocal %23 {approx = true} : vector<128x1xf32> -> vector<128x1xf32>
    %25 = vector.broadcast %24 : vector<128x1xf32> to vector<128x128xf32>
    %26 = arith.mulf %21, %25 : vector<128x128xf32>
    %27 = arith.truncf %26 : vector<128x128xf32> to vector<128x128xbf16>
    %c0_7 = arith.constant 0 : index
    %c0_8 = arith.constant 0 : index
    %c0_9 = arith.constant 0 : index
    %c0_10 = arith.constant 0 : index
    %28 = vector.load %arg6[%c0_7, %c0_8, %c0_9, %c0_10] : memref<1x4x128x128xbf16, #tpu.memory_space<vmem>>, vector<1x1x128x128xbf16>
    %29 = vector.shape_cast %28 : vector<1x1x128x128xbf16> to vector<128x128xbf16>
    %30 = vector.shape_cast %27 : vector<128x128xbf16> to vector<1x1x128x128xbf16>
    tpu.vector_store %arg6[%c0_7, %c0_8, %c0_9, %c0_10], %30 {strides = array<i32>} : memref<1x4x128x128xbf16, #tpu.memory_space<vmem>>, vector<1x1x128x128xbf16>,
    %31 = vector.extract_strided_slice %6 {offsets = [0, 8], sizes = [128, 8], strides = [1, 1]} : vector<128x32xbf16> to vector<128x8xbf16>
    %c0_11 = arith.constant 0 : index
    %c8 = arith.constant 8 : index
    %32 = vector.load %arg8[%c0_11, %c8] : memref<128x32xbf16, #tpu.memory_space<vmem>>, vector<128x8xbf16>
    %cst_12 = arith.constant dense<0.000000e+00> : vector<128x128xf32>
    %33 = tpu.matmul %31, %32, %cst_12 {dimension_numbers = #tpu.dot_dimension_numbers<[1], [1], [0], [0], [0, 0, 1, 0], [], []>} : vector<128x8xbf16>, vector<128x8xbf16>, vector<128x128xf32> -> vector<128x128xf32>
    %34 = arith.addf %33, %12 : vector<128x128xf32>
    %cst_13 = arith.constant dense<0xFF800000> : vector<128xf32>
    %35 = vector.multi_reduction <maximumf>, %34, %cst_13 [1] : vector<128x128xf32> to vector<128xf32>
    %36 = vector.shape_cast %35 : vector<128xf32> to vector<128x1xf32>
    %37 = vector.broadcast %36 : vector<128x1xf32> to vector<128x128xf32>
    %38 = arith.subf %34, %37 : vector<128x128xf32>
    %39 = math.exp %38 : vector<128x128xf32>
    %cst_14 = arith.constant dense<0.000000e+00> : vector<128xf32>
    %40 = vector.multi_reduction <add>, %39, %cst_14 [1] : vector<128x128xf32> to vector<128xf32>
    %41 = vector.shape_cast %40 : vector<128xf32> to vector<128x1xf32>
    %42 = tpu.reciprocal %41 {approx = true} : vector<128x1xf32> -> vector<128x1xf32>
    %43 = vector.broadcast %42 : vector<128x1xf32> to vector<128x128xf32>
    %44 = arith.mulf %39, %43 : vector<128x128xf32>
    %45 = arith.truncf %44 : vector<128x128xf32> to vector<128x128xbf16>
    %c0_15 = arith.constant 0 : index
    %c1 = arith.constant 1 : index
    %c0_16 = arith.constant 0 : index
    %c0_17 = arith.constant 0 : index
    %46 = vector.load %arg6[%c0_15, %c1, %c0_16, %c0_17] : memref<1x4x128x128xbf16, #tpu.memory_space<vmem>>, vector<1x1x128x128xbf16>
    %47 = vector.shape_cast %46 : vector<1x1x128x128xbf16> to vector<128x128xbf16>
    %48 = vector.shape_cast %45 : vector<128x128xbf16> to vector<1x1x128x128xbf16>
    tpu.vector_store %arg6[%c0_15, %c1, %c0_16, %c0_17], %48 {strides = array<i32>} : memref<1x4x128x128xbf16, #tpu.memory_space<vmem>>, vector<1x1x128x128xbf16>,
    %49 = vector.extract_strided_slice %6 {offsets = [0, 16], sizes = [128, 8], strides = [1, 1]} : vector<128x32xbf16> to vector<128x8xbf16>
    %c0_18 = arith.constant 0 : index
    %c16 = arith.constant 16 : index
    %50 = vector.load %arg8[%c0_18, %c16] : memref<128x32xbf16, #tpu.memory_space<vmem>>, vector<128x8xbf16>
    %cst_19 = arith.constant dense<0.000000e+00> : vector<128x128xf32>
    %51 = tpu.matmul %49, %50, %cst_19 {dimension_numbers = #tpu.dot_dimension_numbers<[1], [1], [0], [0], [0, 0, 1, 0], [], []>} : vector<128x8xbf16>, vector<128x8xbf16>, vector<128x128xf32> -> vector<128x128xf32>
    %52 = arith.addf %51, %12 : vector<128x128xf32>
    %cst_20 = arith.constant dense<0xFF800000> : vector<128xf32>
    %53 = vector.multi_reduction <maximumf>, %52, %cst_20 [1] : vector<128x128xf32> to vector<128xf32>
    %54 = vector.shape_cast %53 : vector<128xf32> to vector<128x1xf32>
    %55 = vector.broadcast %54 : vector<128x1xf32> to vector<128x128xf32>
    %56 = arith.subf %52, %55 : vector<128x128xf32>
    %57 = math.exp %56 : vector<128x128xf32>
    %cst_21 = arith.constant dense<0.000000e+00> : vector<128xf32>
    %58 = vector.multi_reduction <add>, %57, %cst_21 [1] : vector<128x128xf32> to vector<128xf32>
    %59 = vector.shape_cast %58 : vector<128xf32> to vector<128x1xf32>
    %60 = tpu.reciprocal %59 {approx = true} : vector<128x1xf32> -> vector<128x1xf32>
    %61 = vector.broadcast %60 : vector<128x1xf32> to vector<128x128xf32>
    %62 = arith.mulf %57, %61 : vector<128x128xf32>
    %63 = arith.truncf %62 : vector<128x128xf32> to vector<128x128xbf16>
    %c0_22 = arith.constant 0 : index
    %c2 = arith.constant 2 : index
    %c0_23 = arith.constant 0 : index
    %c0_24 = arith.constant 0 : index
    %64 = vector.load %arg6[%c0_22, %c2, %c0_23, %c0_24] : memref<1x4x128x128xbf16, #tpu.memory_space<vmem>>, vector<1x1x128x128xbf16>
    %65 = vector.shape_cast %64 : vector<1x1x128x128xbf16> to vector<128x128xbf16>
    %66 = vector.shape_cast %63 : vector<128x128xbf16> to vector<1x1x128x128xbf16>
    tpu.vector_store %arg6[%c0_22, %c2, %c0_23, %c0_24], %66 {strides = array<i32>} : memref<1x4x128x128xbf16, #tpu.memory_space<vmem>>, vector<1x1x128x128xbf16>,
    %67 = vector.extract_strided_slice %6 {offsets = [0, 24], sizes = [128, 8], strides = [1, 1]} : vector<128x32xbf16> to vector<128x8xbf16>
    %c0_25 = arith.constant 0 : index
    %c24 = arith.constant 24 : index
    %68 = vector.load %arg8[%c0_25, %c24] : memref<128x32xbf16, #tpu.memory_space<vmem>>, vector<128x8xbf16>
    %cst_26 = arith.constant dense<0.000000e+00> : vector<128x128xf32>
    %69 = tpu.matmul %67, %68, %cst_26 {dimension_numbers = #tpu.dot_dimension_numbers<[1], [1], [0], [0], [0, 0, 1, 0], [], []>} : vector<128x8xbf16>, vector<128x8xbf16>, vector<128x128xf32> -> vector<128x128xf32>
    %70 = arith.addf %69, %12 : vector<128x128xf32>
    %cst_27 = arith.constant dense<0xFF800000> : vector<128xf32>
    %71 = vector.multi_reduction <maximumf>, %70, %cst_27 [1] : vector<128x128xf32> to vector<128xf32>
    %72 = vector.shape_cast %71 : vector<128xf32> to vector<128x1xf32>
    %73 = vector.broadcast %72 : vector<128x1xf32> to vector<128x128xf32>
    %74 = arith.subf %70, %73 : vector<128x128xf32>
    %75 = math.exp %74 : vector<128x128xf32>
    %cst_28 = arith.constant dense<0.000000e+00> : vector<128xf32>
    %76 = vector.multi_reduction <add>, %75, %cst_28 [1] : vector<128x128xf32> to vector<128xf32>
    %77 = vector.shape_cast %76 : vector<128xf32> to vector<128x1xf32>
    %78 = tpu.reciprocal %77 {approx = true} : vector<128x1xf32> -> vector<128x1xf32>
    %79 = vector.broadcast %78 : vector<128x1xf32> to vector<128x128xf32>
    %80 = arith.mulf %75, %79 : vector<128x128xf32>
    %81 = arith.truncf %80 : vector<128x128xf32> to vector<128x128xbf16>
    %c0_29 = arith.constant 0 : index
    %c3 = arith.constant 3 : index
    %c0_30 = arith.constant 0 : index
    %c0_31 = arith.constant 0 : index
    %82 = vector.load %arg6[%c0_29, %c3, %c0_30, %c0_31] : memref<1x4x128x128xbf16, #tpu.memory_space<vmem>>, vector<1x1x128x128xbf16>
    %83 = vector.shape_cast %82 : vector<1x1x128x128xbf16> to vector<128x128xbf16>
    %84 = vector.shape_cast %81 : vector<128x128xbf16> to vector<1x1x128x128xbf16>
    tpu.vector_store %arg6[%c0_29, %c3, %c0_30, %c0_31], %84 {strides = array<i32>} : memref<1x4x128x128xbf16, #tpu.memory_space<vmem>>, vector<1x1x128x128xbf16>,
    return
  }
  func.func @transform_0(%arg0: i32, %arg1: i32, %arg2: i32) -> (i32, i32, i32) {
    %c0_i32 = arith.constant 0 : i32
    %c0_i32_0 = arith.constant 0 : i32
    %c0_i32_1 = arith.constant 0 : i32
    return %arg0, %c0_i32, %c0_i32_0 : i32, i32, i32
  }
  func.func @transform_1(%arg0: i32, %arg1: i32, %arg2: i32) -> (i32, i32, i32) {
    %c0_i32 = arith.constant 0 : i32
    %c0_i32_0 = arith.constant 0 : i32
    %c0_i32_1 = arith.constant 0 : i32
    return %arg1, %c0_i32, %c0_i32_0 : i32, i32, i32
  }
  func.func @transform_2(%arg0: i32, %arg1: i32, %arg2: i32) -> (i32, i32, i32) {
    %c0_i32 = arith.constant 0 : i32
    %c0_i32_0 = arith.constant 0 : i32
    %c0_i32_1 = arith.constant 0 : i32
    return %arg1, %c0_i32, %c0_i32_0 : i32, i32, i32
  }
  func.func @transform_3(%arg0: i32, %arg1: i32, %arg2: i32) -> (i32, i32, i32, i32) {
    %c0_i32 = arith.constant 0 : i32
    %c0_i32_0 = arith.constant 0 : i32
    return %arg0, %arg1, %arg2, %c0_i32 : i32, i32, i32, i32
  }
}

</mosaic_0001>

<llo_original>
// kernel: tpu_custom_call.1
$region0: #{tpu_custom_call.1}
  #allocation0 [shape = 'u32[]', space=smem, size = 0x4, offset = 0x4, fixed_abs, tag = 'smem constant byte address 0x4 - core index']
  #allocation1 [shape = 'u32[144,128]{1,0:T(1,128)}', space=vmem, size = 0x12000, scoped, tag = 'internal scratch']
  #allocation2 [shape = 'bf16[128,32]{1,0:T(8,128)(2,1)}', space=vmem, size = 0x8000, scoped, tag = 'scratch operand']
  #allocation3 [shape = 'bf16[128,32]{1,0:T(8,128)(2,1)}', space=vmem, size = 0x8000, scoped, tag = 'scratch operand']
  %s0 = inlined_call_operand.vmem [shape: bf16[2,128,32], index: 0, kind: input, shape index: {}]
  %s1 = inlined_call_operand.vmem [shape: bf16[1,32,64], index: 1, kind: input, shape index: {}]
  %s2 = inlined_call_operand.vmem [shape: f32[1,1,64], index: 2, kind: input, shape index: {}]
  %s3 = inlined_call_operand.hbm [shape: bf16[2,4,128,128], index: 3, kind: output, shape index: {}]
  %s4 = sld [smem:[#allocation0]]
  $region49: #{tpu_custom_call.1} parent=0
    _
  %s6 = ssub.s32 1, %s4
  %s7 = scalar_select 0, %s6, %s4
  $region1: #{tpu_custom_call.1} parent=0
    #allocation4 [shape = 'u8[262144]{0}', space=vmem, size = 0x40000, scoped, tag = 'output window, operand 0']
    #allocation5 [shape = 's32[2]{0}', space=sflag, size = 0x8, scoped, tag = 'scoped memory for tpu_custom_call.1']
    %8 = vsyncpa [#allocation5], 0
    %s9 = scalar_lea.sflag [#allocation5], 1
    %10 = vsyncpa %s9, 0
    loop: start=0, step=1, limit=4
    $region2: #{tpu_custom_call.1} parent=1 // loop_pre_header
      _
    $region3: #{tpu_custom_call.1} parent=1 // loop_header
      %s12 = sphi 0, %s16
      %p13 = scmp.ge.s32.totalorder %s12, 4
      %s19 = sphi 0, %s38
      %s20 = sphi 0, %s34
      %s21 = sphi 0, %s30
      %s22 = sphi 0, %s19
      %s23 = sphi 0, %s20
      %s24 = sphi 0, %s21
      %s25 = sphi 0, %s22
      %s26 = sphi 0, %s23
      %s27 = sphi 0, %s24
      %s41 = sphi 0, %s43
      %s44 = sphi 0, %s41
      %s45 = sphi 0, %s44
      %s61 = sphi 0, %s45
      %s67 = sphi 0, %s69
      %s70 = sphi 0, %s67
      %s71 = sphi 0, %s70
      %s87 = sphi 0, %s71
      %s93 = sphi 0, %s95
      %s96 = sphi 0, %s93
      %s97 = sphi 0, %s96
      %s113 = sphi 0, %s97
      %s123 = sphi 0, %s125
      %s126 = sphi 0, %s123
      %s127 = sphi 0, %s126
      %s143 = sphi 0, %s127
    $region4: #{tpu_custom_call.1} parent=1 // loop_header_branch
      %15 = sbr.rel (%p13) target = $region8
    $region5: #{tpu_custom_call.1} parent=1 // loop_body
      %s17 = ssub.s32 %s12, 1
      %s18 = ssub.s32 %s12, 2
      %s28 = sadd.s32 1, %s21
      %p29 = scmp.ge.s32.totalorder %s28, 1
      %s30 = scalar_select %p29, 0, %s28
      %s31 = sadd.s32 1, %s20
      %s32 = scalar_select %p29, %s31, %s20
      %p33 = scmp.ge.s32.totalorder %s32, 1
      %s34 = scalar_select %p33, 0, %s32
      %s35 = sadd.s32 1, %s19
      %s36 = scalar_select %p33, %s35, %s19
      %p37 = scmp.ge.s32.totalorder %s36, 2
      %s38 = scalar_select %p37, 0, %s36
      %s39 = ssub.s32 %s19, %s38
      %p40 = scmp.eq.s32.totalorder %s39, 0
      %s42 = sadd.s32 %s41, 1
      %s43 = scalar_select %p40, %s41, %s42
      %p46 = pneg %p40
      %p47 = scmp.eq.s32.totalorder %s12, 1
      %p48 = por %p46, %p47
      %p49 = scmp.ne.s32.totalorder %s41, %s44
      %p50 = scmp.eq.s32.totalorder %s12, 0
      %p51 = por %p49, %p50
      %p52 = scmp.ne.s32.totalorder %s41, %s44
      %p53 = scmp.eq.s32.totalorder %s17, 1
      %p54 = por %p52, %p53
      %p55 = scmp.ne.s32.totalorder %s44, %s45
      %p56 = scmp.eq.s32.totalorder %s17, 0
      %p57 = por %p55, %p56
      %p58 = scmp.ne.s32.totalorder %s44, %s45
      %p59 = scmp.eq.s32.totalorder %s18, 1
      %p60 = por %p58, %p59
      %p62 = scmp.ne.s32.totalorder %s45, %s61
      %p63 = scmp.eq.s32.totalorder %s18, 0
      %p64 = por %p62, %p63
      %s65 = ssub.s32 %s20, %s34
      %p66 = scmp.eq.s32.totalorder %s65, 0
      %s68 = sadd.s32 %s67, 1
      %s69 = scalar_select %p66, %s67, %s68
      %p72 = pneg %p66
      %p73 = scmp.eq.s32.totalorder %s12, 1
      %p74 = por %p72, %p73
      %p75 = scmp.ne.s32.totalorder %s67, %s70
      %p76 = scmp.eq.s32.totalorder %s12, 0
      %p77 = por %p75, %p76
      %p78 = scmp.ne.s32.totalorder %s67, %s70
      %p79 = scmp.eq.s32.totalorder %s17, 1
      %p80 = por %p78, %p79
      %p81 = scmp.ne.s32.totalorder %s70, %s71
      %p82 = scmp.eq.s32.totalorder %s17, 0
      %p83 = por %p81, %p82
      %p84 = scmp.ne.s32.totalorder %s70, %s71
      %p85 = scmp.eq.s32.totalorder %s18, 1
      %p86 = por %p84, %p85
      %p88 = scmp.ne.s32.totalorder %s71, %s87
      %p89 = scmp.eq.s32.totalorder %s18, 0
      %p90 = por %p88, %p89
      %s91 = ssub.s32 %s20, %s34
      %p92 = scmp.eq.s32.totalorder %s91, 0
      %s94 = sadd.s32 %s93, 1
      %s95 = scalar_select %p92, %s93, %s94
      %p98 = pneg %p92
      %p99 = scmp.eq.s32.totalorder %s12, 1
      %p100 = por %p98, %p99
      %p101 = scmp.ne.s32.totalorder %s93, %s96
      %p102 = scmp.eq.s32.totalorder %s12, 0
      %p103 = por %p101, %p102
      %p104 = scmp.ne.s32.totalorder %s93, %s96
      %p105 = scmp.eq.s32.totalorder %s17, 1
      %p106 = por %p104, %p105
      %p107 = scmp.ne.s32.totalorder %s96, %s97
      %p108 = scmp.eq.s32.totalorder %s17, 0
      %p109 = por %p107, %p108
      %p110 = scmp.ne.s32.totalorder %s96, %s97
      %p111 = scmp.eq.s32.totalorder %s18, 1
      %p112 = por %p110, %p111
      %p114 = scmp.ne.s32.totalorder %s97, %s113
      %p115 = scmp.eq.s32.totalorder %s18, 0
      %p116 = por %p114, %p115
      %s117 = ssub.s32 %s19, %s38
      %s118 = ssub.s32 %s20, %s34
      %s119 = sor.u32 %s117, %s118
      %s120 = ssub.s32 %s21, %s30
      %s121 = sor.u32 %s119, %s120
      %p122 = scmp.eq.s32.totalorder %s121, 0
      %s124 = sadd.s32 %s123, 1
      %s125 = scalar_select %p122, %s123, %s124
      %p128 = pneg %p122
      %p129 = scmp.eq.s32.totalorder %s12, 1
      %p130 = por %p128, %p129
      %p131 = scmp.ne.s32.totalorder %s123, %s126
      %p132 = scmp.eq.s32.totalorder %s12, 0
      %p133 = por %p131, %p132
      %p134 = scmp.ne.s32.totalorder %s123, %s126
      %p135 = scmp.eq.s32.totalorder %s17, 1
      %p136 = por %p134, %p135
      %p137 = scmp.ne.s32.totalorder %s126, %s127
      %p138 = scmp.eq.s32.totalorder %s17, 0
      %p139 = por %p137, %p138
      %p140 = scmp.ne.s32.totalorder %s126, %s127
      %p141 = scmp.eq.s32.totalorder %s18, 1
      %p142 = por %p140, %p141
      %p144 = scmp.ne.s32.totalorder %s127, %s143
      %p145 = scmp.eq.s32.totalorder %s18, 0
      %p146 = por %p144, %p145
      %p147 = scmp.le.s32.totalorder 1, %s12
      %p148 = scmp.lt.s32.totalorder %s12, 3
      %p149 = pnand %p147, %p148
      %p150 = pneg %p149
      // Predicated region
      $region9: #{tpu_custom_call.1} parent=5 // pred_check
        _
      $region10: #{tpu_custom_call.1} parent=5 // pred_check_branch
        %152 = sbr.rel (%p149) target = $region12
      $region11: #{tpu_custom_call.1} parent=5 // pred_region
        %s153 = ssub.s32 %s12, 1
        // Predicated region
        $region13: #{tpu_custom_call.1} parent=11 // pred_check
          %p154 = pneg %p83
        $region14: #{tpu_custom_call.1} parent=11 // pred_check_branch
          %156 = sbr.rel (%p154) target = $region16
        $region15: #{tpu_custom_call.1} parent=11 // pred_region
          %p157 = scmp.lt.s32.totalorder %s23, 0
          %s158 = scalar_select %p157, %s23, 0
          %s159 = smul.addr %s158, 4
          %s160 = smul.addr %s159, 4
          %s161 = scalar_lea.vmem %s1, %s160
        $region16: #{tpu_custom_call.1} parent=11 // pred_fallthru
          _
        // Predicated region
        $region17: #{tpu_custom_call.1} parent=11 // pred_check
          %p162 = pneg %p109
        $region18: #{tpu_custom_call.1} parent=11 // pred_check_branch
          %164 = sbr.rel (%p162) target = $region20
        $region19: #{tpu_custom_call.1} parent=11 // pred_region
          %p165 = scmp.lt.s32.totalorder %s23, 0
          %s166 = scalar_select %p165, %s23, 0
          %s167 = scalar_lea.vmem %s2, %s166
        $region20: #{tpu_custom_call.1} parent=11 // pred_fallthru
          _
      $region12: #{tpu_custom_call.1} parent=5 // pred_fallthru
        _
      %p168 = scmp.lt.s32.totalorder %s12, 2
      // Predicated region
      $region21: #{tpu_custom_call.1} parent=5 // pred_check
        %p169 = pneg %p168
      $region22: #{tpu_custom_call.1} parent=5 // pred_check_branch
        %171 = sbr.rel (%p169) target = $region24
      $region23: #{tpu_custom_call.1} parent=5 // pred_region
        // Predicated region
        $region25: #{tpu_custom_call.1} parent=23 // pred_check
          %p172 = pneg %p51
        $region26: #{tpu_custom_call.1} parent=23 // pred_check_branch
          %174 = sbr.rel (%p172) target = $region28
        $region27: #{tpu_custom_call.1} parent=23 // pred_region
          %p175 = scmp.lt.s32.totalorder %s19, 1
          %s176 = scalar_select %p175, %s19, 1
          %s177 = smul.addr %s176, 16
          %s178 = smul.addr %s177, 4
          %s179 = scalar_lea.vmem %s0, %s178
        $region28: #{tpu_custom_call.1} parent=23 // pred_fallthru
          _
      $region24: #{tpu_custom_call.1} parent=5 // pred_fallthru
        _
      %p180 = scmp.le.s32.totalorder 1, %s12
      %p181 = scmp.lt.s32.totalorder %s12, 3
      %p182 = pnand %p180, %p181
      %p183 = pneg %p182
      // Predicated region
      $region29: #{tpu_custom_call.1} parent=5 // pred_check
        _
      $region30: #{tpu_custom_call.1} parent=5 // pred_check_branch
        %185 = sbr.rel (%p182) target = $region32
      $region31: #{tpu_custom_call.1} parent=5 // pred_region
        %s186 = ssub.s32 %s12, 1
        %p187 = scmp.lt.s32.totalorder %s22, 1
        %s188 = scalar_select %p187, %s22, 1
        %s189 = smul.addr %s188, 16
        %s190 = smul.addr %s189, 4
        %s191 = scalar_lea.vmem %s0, %s190
        %p192 = pneg %p57
        %p193 = pneg %p54
        %p194 = scmp.lt.s32.totalorder %s23, 0
        %s195 = scalar_select %p194, %s23, 0
        %s196 = smul.addr %s195, 4
        %s197 = smul.addr %s196, 4
        %s198 = scalar_lea.vmem %s1, %s197
        %p199 = pneg %p83
        %p200 = pneg %p80
        %p201 = scmp.lt.s32.totalorder %s23, 0
        %s202 = scalar_select %p201, %s23, 0
        %s203 = scalar_lea.vmem %s2, %s202
        %p204 = pneg %p109
        %p205 = pneg %p106
        %p206 = pneg %p139
        %p207 = pneg %p136
        %s208 = sand.u32 %s126, 1
        %s209 = scalar_lea.sflag [#allocation5], %s208
        %s210 = sand.u32 %s126, 1
        %s211 = smul.addr %s210, 256
        %s212 = scalar_lea.vmem [#allocation4], %s211
        %p213 = scmp.lt.s32.totalorder %s22, 1
        %s214 = scalar_select %p213, %s22, 1
        %s215 = smul.addr %s214, 16
        %s216 = smul.addr %s215, 4
        %s217 = scalar_lea.vmem %s0, %s216
        %p218 = scmp.lt.s32.totalorder %s23, 0
        %s219 = scalar_select %p218, %s23, 0
        %s220 = smul.addr %s219, 4
        %s221 = smul.addr %s220, 4
        %s222 = scalar_lea.vmem %s1, %s221
        %p223 = scmp.lt.s32.totalorder %s23, 0
        %s224 = scalar_select %p223, %s23, 0
        %s225 = scalar_lea.vmem %s2, %s224
        %s226 = smul.u32 4, %s23
        %s227 = smul.u32 16, %s24
        %p229 = scmp.eq.s32.totalorder %s24, 0
        // Predicated region
        $region33: #{tpu_custom_call.1} parent=31 // pred_check
          %p230 = pneg %p229
        $region34: #{tpu_custom_call.1} parent=31 // pred_check_branch
          %232 = sbr.rel (%p230) target = $region36
        $region35: #{tpu_custom_call.1} parent=31 // pred_region
          %v233 = vld [vmem:[%s217] sm:$0xf]
          %v234 = vld [vmem:[%s217 + $0x4] sm:$0xf]
          %v235 = vld [vmem:[%s217 + $0x8] sm:$0xf]
          %v236 = vld [vmem:[%s217 + $0xc] sm:$0xf]
          %v237 = vld [vmem:[%s217 + $0x10] sm:$0xf]
          %v238 = vld [vmem:[%s217 + $0x14] sm:$0xf]
          %v239 = vld [vmem:[%s217 + $0x18] sm:$0xf]
          %v240 = vld [vmem:[%s217 + $0x1c] sm:$0xf]
          %v241 = vld [vmem:[%s217 + $0x20] sm:$0xf]
          %v242 = vld [vmem:[%s217 + $0x24] sm:$0xf]
          %v243 = vld [vmem:[%s217 + $0x28] sm:$0xf]
          %v244 = vld [vmem:[%s217 + $0x2c] sm:$0xf]
          %v245 = vld [vmem:[%s217 + $0x30] sm:$0xf]
          %v246 = vld [vmem:[%s217 + $0x34] sm:$0xf]
          %v247 = vld [vmem:[%s217 + $0x38] sm:$0xf]
          %v248 = vld [vmem:[%s217 + $0x3c] sm:$0xf]
          %v249 = vld [vmem:[%s222] sm:$0xf]
          %v250 = vld [vmem:[%s222 + $0x4] sm:$0xf]
          %v251 = vld [vmem:[%s222 + $0x8] sm:$0xf]
          %v252 = vld [vmem:[%s222 + $0xc] sm:$0xf]
          %v253 = vld [vmem:[%s225] sm:$0x1]
          %v255 = vlaneseq
          %v256 = vshrl.u32 %v255, 7
          %v257 = vsub.s32 0, %v256
          %v258 = vrot.slane %v253, %v257
          %v276 = vunpack.c.l.b16 %v233
          %v277 = vunpack.c.l.b16 %v234
          %v278 = vunpack.c.l.b16 %v235
          %v279 = vunpack.c.l.b16 %v236
          %v280 = vunpack.c.l.b16 %v237
          %v281 = vunpack.c.l.b16 %v238
          %v282 = vunpack.c.l.b16 %v239
          %v283 = vunpack.c.l.b16 %v240
          %v284 = vunpack.c.l.b16 %v241
          %v285 = vunpack.c.l.b16 %v242
          %v286 = vunpack.c.l.b16 %v243
          %v287 = vunpack.c.l.b16 %v244
          %v288 = vunpack.c.l.b16 %v245
          %v289 = vunpack.c.l.b16 %v246
          %v290 = vunpack.c.l.b16 %v247
          %v291 = vunpack.c.l.b16 %v248
          %v292 = vpack.c.b16 %v277, %v276
          %v293 = vpack.c.b16 %v279, %v278
          %v294 = vpack.c.b16 %v281, %v280
          %v295 = vpack.c.b16 %v283, %v282
          %v296 = vpack.c.b16 %v285, %v284
          %v297 = vpack.c.b16 %v287, %v286
          %v298 = vpack.c.b16 %v289, %v288
          %v299 = vpack.c.b16 %v291, %v290
          %v304 = vunpack.c.l.b16 %v249
          %v305 = vunpack.c.l.b16 %v250
          %v306 = vunpack.c.l.b16 %v251
          %v307 = vunpack.c.l.b16 %v252
          %v308 = vpack.c.b16 %v305, %v304
          %v309 = vpack.c.b16 %v307, %v306
          %vm312 = vcmask 261120
          %v314 = vsel %vm312, %v292, 0
          %v317 = vsel %vm312, %v293, 0
          %v320 = vsel %vm312, %v294, 0
          %v323 = vsel %vm312, %v295, 0
          %v326 = vsel %vm312, %v296, 0
          %v329 = vsel %vm312, %v297, 0
          %v332 = vsel %vm312, %v298, 0
          %v335 = vsel %vm312, %v299, 0
          %337 = vmatprep.subr.bf16.mxu0 0
          %338 = vmatpush1.bf16.msra.mxu0 0
          %339 = vmatprep.subr.bf16.mxu0 0
          %340 = vmatpush1.bf16.msra.mxu0 0
          %341 = vmatprep.subr.bf16.mxu0 0
          %342 = vmatpush1.bf16.msra.mxu0 0
          %343 = vmatprep.subr.bf16.mxu0 0
          %344 = vmatpush1.bf16.msra.mxu0 0
          %345 = vmatprep.subr.bf16.mxu0 0
          %346 = vmatpush1.bf16.msra.mxu0 0
          %347 = vmatprep.subr.bf16.mxu0 0
          %348 = vmatpush1.bf16.msra.mxu0 0
          %349 = vmatprep.subr.bf16.mxu0 0
          %350 = vmatpush1.bf16.msra.mxu0 %v309
          %351 = vmatprep.subr.bf16.mxu0 0
          %352 = vmatpush1.bf16.msra.mxu0 %v308
          %353 = vmatprep.subr.bf16.mxu0 0
          %354 = vmatpush2.bf16.msra.mxu0 0
          %355 = vmatprep.subr.bf16.mxu0 0
          %356 = vmatpush2.bf16.msra.mxu0 0
          %357 = vmatprep.subr.bf16.mxu0 0
          %358 = vmatpush2.bf16.msra.mxu0 0
          %359 = vmatprep.subr.bf16.mxu0 0
          %360 = vmatpush2.bf16.msra.mxu0 0
          %361 = vmatprep.subr.bf16.mxu0 0
          %362 = vmatpush2.bf16.msra.mxu0 0
          %363 = vmatprep.subr.bf16.mxu0 0
          %364 = vmatpush2.bf16.msra.mxu0 0
          %365 = vmatprep.subr.bf16.mxu0 0
          %366 = vmatpush2.bf16.msra.mxu0 0
          %367 = vmatprep.subr.bf16.mxu0 0
          %368 = vmatpush2.bf16.msra.mxu0 0
          %369 = vmatprep.mubr.bf16.mxu0 0
          %370 = vmatmul.mubr.bf16.gmra.mxu0 %v314
          %v371 = vpop.f32.mrf.mxu0
          %v372 = vadd.f32 %v258, %v371
          %v373 = vpop.f32.mrf.mxu0
          %v374 = vpop.f32.mrf.mxu0
          %v375 = vadd.f32 %v258, %v374
          %v376 = vpop.f32.mrf.mxu0
          %377 = vmatprep.mubr.bf16.mxu0 0
          %378 = vmatmul.mubr.bf16.gmra.mxu0 %v317
          %v379 = vpop.f32.mrf.mxu0
          %v380 = vadd.f32 %v258, %v379
          %v381 = vpop.f32.mrf.mxu0
          %v382 = vpop.f32.mrf.mxu0
          %v383 = vadd.f32 %v258, %v382
          %v384 = vpop.f32.mrf.mxu0
          %385 = vmatprep.mubr.bf16.mxu0 0
          %386 = vmatmul.mubr.bf16.gmra.mxu0 %v320
          %v387 = vpop.f32.mrf.mxu0
          %v388 = vadd.f32 %v258, %v387
          %v389 = vpop.f32.mrf.mxu0
          %v390 = vpop.f32.mrf.mxu0
          %v391 = vadd.f32 %v258, %v390
          %v392 = vpop.f32.mrf.mxu0
          %393 = vmatprep.mubr.bf16.mxu0 0
          %394 = vmatmul.mubr.bf16.gmra.mxu0 %v323
          %v395 = vpop.f32.mrf.mxu0
          %v396 = vadd.f32 %v258, %v395
          %v397 = vpop.f32.mrf.mxu0
          %v398 = vpop.f32.mrf.mxu0
          %v399 = vadd.f32 %v258, %v398
          %v400 = vpop.f32.mrf.mxu0
          %401 = vmatprep.mubr.bf16.mxu0 0
          %402 = vmatmul.mubr.bf16.gmra.mxu0 %v326
          %v403 = vpop.f32.mrf.mxu0
          %v404 = vadd.f32 %v258, %v403
          %v405 = vpop.f32.mrf.mxu0
          %v406 = vpop.f32.mrf.mxu0
          %v407 = vadd.f32 %v258, %v406
          %v408 = vpop.f32.mrf.mxu0
          %409 = vmatprep.mubr.bf16.mxu0 0
          %410 = vmatmul.mubr.bf16.gmra.mxu0 %v329
          %v411 = vpop.f32.mrf.mxu0
          %v412 = vadd.f32 %v258, %v411
          %v413 = vpop.f32.mrf.mxu0
          %v414 = vpop.f32.mrf.mxu0
          %v415 = vadd.f32 %v258, %v414
          %v416 = vpop.f32.mrf.mxu0
          %417 = vmatprep.mubr.bf16.mxu0 0
          %418 = vmatmul.mubr.bf16.gmra.mxu0 %v332
          %v419 = vpop.f32.mrf.mxu0
          %v420 = vadd.f32 %v258, %v419
          %v421 = vpop.f32.mrf.mxu0
          %v422 = vpop.f32.mrf.mxu0
          %v423 = vadd.f32 %v258, %v422
          %v424 = vpop.f32.mrf.mxu0
          %425 = vmatprep.mubr.bf16.mxu0 0
          %426 = vmatmul.mubr.bf16.gmra.mxu0 %v335
          %v427 = vpop.f32.mrf.mxu0
          %v428 = vadd.f32 %v258, %v427
          %v429 = vpop.f32.mrf.mxu0
          %v430 = vpop.f32.mrf.mxu0
          %v431 = vadd.f32 %v258, %v430
          %v432 = vpop.f32.mrf.mxu0
          %433 = vdwg.mxu0
          %v434 = vpack.c.bf16 %v375, %v372
          %v435 = vpack.c.bf16 %v383, %v380
          %v436 = vpack.c.bf16 %v391, %v388
          %v437 = vpack.c.bf16 %v399, %v396
          %v438 = vpack.c.bf16 %v407, %v404
          %v439 = vpack.c.bf16 %v415, %v412
          %v440 = vpack.c.bf16 %v423, %v420
          %v441 = vpack.c.bf16 %v431, %v428
          %v450 = vunpack.c.l.b16 %v434
          %v451 = vunpack.c.h.b16 %v434
          %v452 = vunpack.c.l.b16 %v435
          %v453 = vunpack.c.h.b16 %v435
          %v454 = vunpack.c.l.b16 %v436
          %v455 = vunpack.c.h.b16 %v436
          %v456 = vunpack.c.l.b16 %v437
          %v457 = vunpack.c.h.b16 %v437
          %v458 = vunpack.c.l.b16 %v438
          %v459 = vunpack.c.h.b16 %v438
          %v460 = vunpack.c.l.b16 %v439
          %v461 = vunpack.c.h.b16 %v439
          %v462 = vunpack.c.l.b16 %v440
          %v463 = vunpack.c.h.b16 %v440
          %v464 = vunpack.c.l.b16 %v441
          %v465 = vunpack.c.h.b16 %v441
          %v466 = vpack.c.b16 %v450, %v450
          %v467 = vpack.c.b16 %v451, %v451
          %v468 = vpack.c.b16 %v452, %v452
          %v469 = vpack.c.b16 %v453, %v453
          %v470 = vpack.c.b16 %v454, %v454
          %v471 = vpack.c.b16 %v455, %v455
          %v472 = vpack.c.b16 %v456, %v456
          %v473 = vpack.c.b16 %v457, %v457
          %v474 = vpack.c.b16 %v458, %v458
          %v475 = vpack.c.b16 %v459, %v459
          %v476 = vpack.c.b16 %v460, %v460
          %v477 = vpack.c.b16 %v461, %v461
          %v478 = vpack.c.b16 %v462, %v462
          %v479 = vpack.c.b16 %v463, %v463
          %v480 = vpack.c.b16 %v464, %v464
          %v481 = vpack.c.b16 %v465, %v465
          %vm498 = vcmask 257024
          %499 = vst.msk [vmem:[#allocation2] sm:$0xf] %vm498, %v466
          %500 = vst.msk [vmem:[#allocation2 + $0x4] sm:$0xf] %vm498, %v467
          %501 = vst.msk [vmem:[#allocation2 + $0x8] sm:$0xf] %vm498, %v468
          %502 = vst.msk [vmem:[#allocation2 + $0xc] sm:$0xf] %vm498, %v469
          %503 = vst.msk [vmem:[#allocation2 + $0x10] sm:$0xf] %vm498, %v470
          %504 = vst.msk [vmem:[#allocation2 + $0x14] sm:$0xf] %vm498, %v471
          %505 = vst.msk [vmem:[#allocation2 + $0x18] sm:$0xf] %vm498, %v472
          %506 = vst.msk [vmem:[#allocation2 + $0x1c] sm:$0xf] %vm498, %v473
          %507 = vst.msk [vmem:[#allocation2 + $0x20] sm:$0xf] %vm498, %v474
          %508 = vst.msk [vmem:[#allocation2 + $0x24] sm:$0xf] %vm498, %v475
          %509 = vst.msk [vmem:[#allocation2 + $0x28] sm:$0xf] %vm498, %v476
          %510 = vst.msk [vmem:[#allocation2 + $0x2c] sm:$0xf] %vm498, %v477
          %511 = vst.msk [vmem:[#allocation2 + $0x30] sm:$0xf] %vm498, %v478
          %512 = vst.msk [vmem:[#allocation2 + $0x34] sm:$0xf] %vm498, %v479
          %513 = vst.msk [vmem:[#allocation2 + $0x38] sm:$0xf] %vm498, %v480
          %514 = vst.msk [vmem:[#allocation2 + $0x3c] sm:$0xf] %vm498, %v481
          %515 = vrot.lane.b32.xlu0 %v466, 96
          %v516 = vpop.permute.xlu0 %515
          %517 = vrot.lane.b32.xlu0 %v467, 96
          %v518 = vpop.permute.xlu0 %517
          %519 = vrot.lane.b32.xlu0 %v468, 96
          %v520 = vpop.permute.xlu0 %519
          %521 = vrot.lane.b32.xlu0 %v469, 96
          %v522 = vpop.permute.xlu0 %521
          %523 = vrot.lane.b32.xlu0 %v470, 96
          %v524 = vpop.permute.xlu0 %523
          %525 = vrot.lane.b32.xlu0 %v471, 96
          %v526 = vpop.permute.xlu0 %525
          %527 = vrot.lane.b32.xlu0 %v472, 96
          %v528 = vpop.permute.xlu0 %527
          %529 = vrot.lane.b32.xlu0 %v473, 96
          %v530 = vpop.permute.xlu0 %529
          %531 = vrot.lane.b32.xlu0 %v474, 96
          %v532 = vpop.permute.xlu0 %531
          %533 = vrot.lane.b32.xlu0 %v475, 96
          %v534 = vpop.permute.xlu0 %533
          %535 = vrot.lane.b32.xlu0 %v476, 96
          %v536 = vpop.permute.xlu0 %535
          %537 = vrot.lane.b32.xlu0 %v477, 96
          %v538 = vpop.permute.xlu0 %537
          %539 = vrot.lane.b32.xlu0 %v478, 96
          %v540 = vpop.permute.xlu0 %539
          %541 = vrot.lane.b32.xlu0 %v479, 96
          %v542 = vpop.permute.xlu0 %541
          %543 = vrot.lane.b32.xlu0 %v480, 96
          %v544 = vpop.permute.xlu0 %543
          %545 = vrot.lane.b32.xlu0 %v481, 96
          %v546 = vpop.permute.xlu0 %545
          %563 = vst.msk [vmem:[#allocation3] sm:$0xf] %vm498, %v516
          %564 = vst.msk [vmem:[#allocation3 + $0x4] sm:$0xf] %vm498, %v518
          %565 = vst.msk [vmem:[#allocation3 + $0x8] sm:$0xf] %vm498, %v520
          %566 = vst.msk [vmem:[#allocation3 + $0xc] sm:$0xf] %vm498, %v522
          %567 = vst.msk [vmem:[#allocation3 + $0x10] sm:$0xf] %vm498, %v524
          %568 = vst.msk [vmem:[#allocation3 + $0x14] sm:$0xf] %vm498, %v526
          %569 = vst.msk [vmem:[#allocation3 + $0x18] sm:$0xf] %vm498, %v528
          %570 = vst.msk [vmem:[#allocation3 + $0x1c] sm:$0xf] %vm498, %v530
          %571 = vst.msk [vmem:[#allocation3 + $0x20] sm:$0xf] %vm498, %v532
          %572 = vst.msk [vmem:[#allocation3 + $0x24] sm:$0xf] %vm498, %v534
          %573 = vst.msk [vmem:[#allocation3 + $0x28] sm:$0xf] %vm498, %v536
          %574 = vst.msk [vmem:[#allocation3 + $0x2c] sm:$0xf] %vm498, %v538
          %575 = vst.msk [vmem:[#allocation3 + $0x30] sm:$0xf] %vm498, %v540
          %576 = vst.msk [vmem:[#allocation3 + $0x34] sm:$0xf] %vm498, %v542
          %577 = vst.msk [vmem:[#allocation3 + $0x38] sm:$0xf] %vm498, %v544
          %578 = vst.msk [vmem:[#allocation3 + $0x3c] sm:$0xf] %vm498, %v546
        $region36: #{tpu_custom_call.1} parent=31 // pred_fallthru
          _
        %s579 = smul.u32 %s24, 128
        %s580 = sshra.s32 %s579, 3
        %s581 = sand.u32 %s579, 7
        %s582 = smul.addr %s580, 4
        %s583 = scalar_lea.vmem [#allocation2], %s582
        %v584 = vld [vmem:[%s583] sm:$0xf]
        %v585 = vld [vmem:[%s583 + $0x4] sm:$0xf]
        %v586 = vld [vmem:[%s583 + $0x8] sm:$0xf]
        %v587 = vld [vmem:[%s583 + $0xc] sm:$0xf]
        %v588 = vld [vmem:[%s583 + $0x10] sm:$0xf]
        %v589 = vld [vmem:[%s583 + $0x14] sm:$0xf]
        %v590 = vld [vmem:[%s583 + $0x18] sm:$0xf]
        %v591 = vld [vmem:[%s583 + $0x1c] sm:$0xf]
        %v592 = vld [vmem:[%s583 + $0x20] sm:$0xf]
        %v593 = vld [vmem:[%s583 + $0x24] sm:$0xf]
        %v594 = vld [vmem:[%s583 + $0x28] sm:$0xf]
        %v595 = vld [vmem:[%s583 + $0x2c] sm:$0xf]
        %v596 = vld [vmem:[%s583 + $0x30] sm:$0xf]
        %v597 = vld [vmem:[%s583 + $0x34] sm:$0xf]
        %v598 = vld [vmem:[%s583 + $0x38] sm:$0xf]
        %v599 = vld [vmem:[%s583 + $0x3c] sm:$0xf]
        %v600 = vlaneseq
        %v601 = vand.u32 %v600, 127
        %vm602 = vcmp.lt.s32.totalorder %v601, 8
        %v603 = vsel %vm602, 0.0, -1e+30
        %v604 = vld [vmem:[#allocation3] sm:$0xf]
        %v605 = vld [vmem:[#allocation3 + $0x4] sm:$0xf]
        %v606 = vld [vmem:[#allocation3 + $0x8] sm:$0xf]
        %v607 = vld [vmem:[#allocation3 + $0xc] sm:$0xf]
        %v608 = vld [vmem:[#allocation3 + $0x10] sm:$0xf]
        %v609 = vld [vmem:[#allocation3 + $0x14] sm:$0xf]
        %v610 = vld [vmem:[#allocation3 + $0x18] sm:$0xf]
        %v611 = vld [vmem:[#allocation3 + $0x1c] sm:$0xf]
        %v612 = vld [vmem:[#allocation3 + $0x20] sm:$0xf]
        %v613 = vld [vmem:[#allocation3 + $0x24] sm:$0xf]
        %v614 = vld [vmem:[#allocation3 + $0x28] sm:$0xf]
        %v615 = vld [vmem:[#allocation3 + $0x2c] sm:$0xf]
        %v616 = vld [vmem:[#allocation3 + $0x30] sm:$0xf]
        %v617 = vld [vmem:[#allocation3 + $0x34] sm:$0xf]
        %v618 = vld [vmem:[#allocation3 + $0x38] sm:$0xf]
        %v619 = vld [vmem:[#allocation3 + $0x3c] sm:$0xf]
        %v636 = vunpack.c.l.b16 %v584
        %v637 = vunpack.c.l.b16 %v585
        %v638 = vunpack.c.l.b16 %v586
        %v639 = vunpack.c.l.b16 %v587
        %v640 = vunpack.c.l.b16 %v588
        %v641 = vunpack.c.l.b16 %v589
        %v642 = vunpack.c.l.b16 %v590
        %v643 = vunpack.c.l.b16 %v591
        %v644 = vunpack.c.l.b16 %v592
        %v645 = vunpack.c.l.b16 %v593
        %v646 = vunpack.c.l.b16 %v594
        %v647 = vunpack.c.l.b16 %v595
        %v648 = vunpack.c.l.b16 %v596
        %v649 = vunpack.c.l.b16 %v597
        %v650 = vunpack.c.l.b16 %v598
        %v651 = vunpack.c.l.b16 %v599
        %v652 = vpack.c.b16 %v637, %v636
        %v653 = vpack.c.b16 %v639, %v638
        %v654 = vpack.c.b16 %v641, %v640
        %v655 = vpack.c.b16 %v643, %v642
        %v656 = vpack.c.b16 %v645, %v644
        %v657 = vpack.c.b16 %v647, %v646
        %v658 = vpack.c.b16 %v649, %v648
        %v659 = vpack.c.b16 %v651, %v650
        %v676 = vunpack.c.l.b16 %v604
        %v677 = vunpack.c.l.b16 %v605
        %v678 = vunpack.c.l.b16 %v606
        %v679 = vunpack.c.l.b16 %v607
        %v680 = vunpack.c.l.b16 %v608
        %v681 = vunpack.c.l.b16 %v609
        %v682 = vunpack.c.l.b16 %v610
        %v683 = vunpack.c.l.b16 %v611
        %v684 = vunpack.c.l.b16 %v612
        %v685 = vunpack.c.l.b16 %v613
        %v686 = vunpack.c.l.b16 %v614
        %v687 = vunpack.c.l.b16 %v615
        %v688 = vunpack.c.l.b16 %v616
        %v689 = vunpack.c.l.b16 %v617
        %v690 = vunpack.c.l.b16 %v618
        %v691 = vunpack.c.l.b16 %v619
        %v692 = vpack.c.b16 %v677, %v676
        %v693 = vpack.c.b16 %v679, %v678
        %v694 = vpack.c.b16 %v681, %v680
        %v695 = vpack.c.b16 %v683, %v682
        %v696 = vpack.c.b16 %v685, %v684
        %v697 = vpack.c.b16 %v687, %v686
        %v698 = vpack.c.b16 %v689, %v688
        %v699 = vpack.c.b16 %v691, %v690
        %vm700 = vcmask 64512
        %v702 = vsel %vm700, %v652, 0
        %v705 = vsel %vm700, %v653, 0
        %v708 = vsel %vm700, %v654, 0
        %v711 = vsel %vm700, %v655, 0
        %v714 = vsel %vm700, %v656, 0
        %v717 = vsel %vm700, %v657, 0
        %v720 = vsel %vm700, %v658, 0
        %v723 = vsel %vm700, %v659, 0
        %v726 = vsel %vm700, %v692, 0
        %v729 = vsel %vm700, %v693, 0
        %v732 = vsel %vm700, %v694, 0
        %v735 = vsel %vm700, %v695, 0
        %v738 = vsel %vm700, %v696, 0
        %v741 = vsel %vm700, %v697, 0
        %v744 = vsel %vm700, %v698, 0
        %v747 = vsel %vm700, %v699, 0
        %749 = vmatprep.subr.bf16.mxu0 0
        %750 = vmatpush1.bf16.xpose.msra.mxu0 %v747
        %751 = vmatprep.subr.bf16.mxu0 0
        %752 = vmatpush1.bf16.xpose.msra.mxu0 %v744
        %753 = vmatprep.subr.bf16.mxu0 0
        %754 = vmatpush1.bf16.xpose.msra.mxu0 %v741
        %755 = vmatprep.subr.bf16.mxu0 0
        %756 = vmatpush1.bf16.xpose.msra.mxu0 %v738
        %757 = vmatprep.subr.bf16.mxu0 0
        %758 = vmatpush1.bf16.xpose.msra.mxu0 %v735
        %759 = vmatprep.subr.bf16.mxu0 0
        %760 = vmatpush1.bf16.xpose.msra.mxu0 %v732
        %761 = vmatprep.subr.bf16.mxu0 0
        %762 = vmatpush1.bf16.xpose.msra.mxu0 %v729
        %763 = vmatprep.subr.bf16.mxu0 0
        %764 = vmatpush1.bf16.xpose.msra.mxu0 %v726
        %765 = vmatprep.subr.bf16.mxu0 0
        %766 = vmatpush2.bf16.xpose.msra.mxu0 0
        %767 = vmatprep.subr.bf16.mxu0 0
        %768 = vmatpush2.bf16.xpose.msra.mxu0 0
        %769 = vmatprep.subr.bf16.mxu0 0
        %770 = vmatpush2.bf16.xpose.msra.mxu0 0
        %771 = vmatprep.subr.bf16.mxu0 0
        %772 = vmatpush2.bf16.xpose.msra.mxu0 0
        %773 = vmatprep.subr.bf16.mxu0 0
        %774 = vmatpush2.bf16.xpose.msra.mxu0 0
        %775 = vmatprep.subr.bf16.mxu0 0
        %776 = vmatpush2.bf16.xpose.msra.mxu0 0
        %777 = vmatprep.subr.bf16.mxu0 0
        %778 = vmatpush2.bf16.xpose.msra.mxu0 0
        %779 = vmatprep.subr.bf16.mxu0 0
        %780 = vmatpush2.bf16.xpose.msra.mxu0 0
        %781 = vmatprep.mubr.bf16.mxu0 0
        %782 = vmatmul.mubr.bf16.gmra.mxu0 %v702
        %v783 = vpop.f32.mrf.mxu0
        %v784 = vadd.f32 %v603, %v783
        %v785 = vpop.f32.mrf.mxu0
        %v786 = vpop.f32.mrf.mxu0
        %v787 = vadd.f32 %v603, %v786
        %v788 = vpop.f32.mrf.mxu0
        %789 = vmatprep.mubr.bf16.mxu0 0
        %790 = vmatmul.mubr.bf16.gmra.mxu0 %v705
        %v791 = vpop.f32.mrf.mxu0
        %v792 = vadd.f32 %v603, %v791
        %v793 = vpop.f32.mrf.mxu0
        %v794 = vpop.f32.mrf.mxu0
        %v795 = vadd.f32 %v603, %v794
        %v796 = vpop.f32.mrf.mxu0
        %797 = vmatprep.mubr.bf16.mxu0 0
        %798 = vmatmul.mubr.bf16.gmra.mxu0 %v708
        %v799 = vpop.f32.mrf.mxu0
        %v800 = vadd.f32 %v603, %v799
        %v801 = vpop.f32.mrf.mxu0
        %v802 = vpop.f32.mrf.mxu0
        %v803 = vadd.f32 %v603, %v802
        %v804 = vpop.f32.mrf.mxu0
        %805 = vmatprep.mubr.bf16.mxu0 0
        %806 = vmatmul.mubr.bf16.gmra.mxu0 %v711
        %v807 = vpop.f32.mrf.mxu0
        %v808 = vadd.f32 %v603, %v807
        %v809 = vpop.f32.mrf.mxu0
        %v810 = vpop.f32.mrf.mxu0
        %v811 = vadd.f32 %v603, %v810
        %v812 = vpop.f32.mrf.mxu0
        %813 = vmatprep.mubr.bf16.mxu0 0
        %814 = vmatmul.mubr.bf16.gmra.mxu0 %v714
        %v815 = vpop.f32.mrf.mxu0
        %v816 = vadd.f32 %v603, %v815
        %v817 = vpop.f32.mrf.mxu0
        %v818 = vpop.f32.mrf.mxu0
        %v819 = vadd.f32 %v603, %v818
        %v820 = vpop.f32.mrf.mxu0
        %821 = vmatprep.mubr.bf16.mxu0 0
        %822 = vmatmul.mubr.bf16.gmra.mxu0 %v717
        %v823 = vpop.f32.mrf.mxu0
        %v824 = vadd.f32 %v603, %v823
        %v825 = vpop.f32.mrf.mxu0
        %v826 = vpop.f32.mrf.mxu0
        %v827 = vadd.f32 %v603, %v826
        %v828 = vpop.f32.mrf.mxu0
        %829 = vmatprep.mubr.bf16.mxu0 0
        %830 = vmatmul.mubr.bf16.gmra.mxu0 %v720
        %v831 = vpop.f32.mrf.mxu0
        %v832 = vadd.f32 %v603, %v831
        %v833 = vpop.f32.mrf.mxu0
        %v834 = vpop.f32.mrf.mxu0
        %v835 = vadd.f32 %v603, %v834
        %v836 = vpop.f32.mrf.mxu0
        %837 = vmatprep.mubr.bf16.mxu0 0
        %838 = vmatmul.mubr.bf16.gmra.mxu0 %v723
        %v839 = vpop.f32.mrf.mxu0
        %v840 = vadd.f32 %v603, %v839
        %v841 = vpop.f32.mrf.mxu0
        %v842 = vpop.f32.mrf.mxu0
        %v843 = vadd.f32 %v603, %v842
        %v844 = vpop.f32.mrf.mxu0
        %845 = vdwg.mxu0
        %846 = vmax.xlane.f32.xlu0 %v784
        %v847 = vpop.xlane.xlu0 %846
        %848 = vmax.xlane.f32.xlu0 %v787
        %v849 = vpop.xlane.xlu0 %848
        %850 = vmax.xlane.f32.xlu0 %v792
        %v851 = vpop.xlane.xlu0 %850
        %852 = vmax.xlane.f32.xlu0 %v795
        %v853 = vpop.xlane.xlu0 %852
        %854 = vmax.xlane.f32.xlu0 %v800
        %v855 = vpop.xlane.xlu0 %854
        %856 = vmax.xlane.f32.xlu0 %v803
        %v857 = vpop.xlane.xlu0 %856
        %858 = vmax.xlane.f32.xlu0 %v808
        %v859 = vpop.xlane.xlu0 %858
        %860 = vmax.xlane.f32.xlu0 %v811
        %v861 = vpop.xlane.xlu0 %860
        %862 = vmax.xlane.f32.xlu0 %v816
        %v863 = vpop.xlane.xlu0 %862
        %864 = vmax.xlane.f32.xlu0 %v819
        %v865 = vpop.xlane.xlu0 %864
        %866 = vmax.xlane.f32.xlu0 %v824
        %v867 = vpop.xlane.xlu0 %866
        %868 = vmax.xlane.f32.xlu0 %v827
        %v869 = vpop.xlane.xlu0 %868
        %870 = vmax.xlane.f32.xlu0 %v832
        %v871 = vpop.xlane.xlu0 %870
        %872 = vmax.xlane.f32.xlu0 %v835
        %v873 = vpop.xlane.xlu0 %872
        %874 = vmax.xlane.f32.xlu0 %v840
        %v875 = vpop.xlane.xlu0 %874
        %876 = vmax.xlane.f32.xlu0 %v843
        %v877 = vpop.xlane.xlu0 %876
        %v878 = vsub.f32 %v784, %v847
        %v879 = vsub.f32 %v787, %v849
        %v880 = vsub.f32 %v792, %v851
        %v881 = vsub.f32 %v795, %v853
        %v882 = vsub.f32 %v800, %v855
        %v883 = vsub.f32 %v803, %v857
        %v884 = vsub.f32 %v808, %v859
        %v885 = vsub.f32 %v811, %v861
        %v886 = vsub.f32 %v816, %v863
        %v887 = vsub.f32 %v819, %v865
        %v888 = vsub.f32 %v824, %v867
        %v889 = vsub.f32 %v827, %v869
        %v890 = vsub.f32 %v832, %v871
        %v891 = vsub.f32 %v835, %v873
        %v892 = vsub.f32 %v840, %v875
        %v893 = vsub.f32 %v843, %v877
        %v894 = vmul.f32 %v878, 1.442695
        %v895 = vpow.pop %v894
        %v896 = vmul.f32 %v879, 1.442695
        %v897 = vpow.pop %v896
        %v898 = vmul.f32 %v880, 1.442695
        %v899 = vpow.pop %v898
        %v900 = vmul.f32 %v881, 1.442695
        %v901 = vpow.pop %v900
        %v902 = vmul.f32 %v882, 1.442695
        %v903 = vpow.pop %v902
        %v904 = vmul.f32 %v883, 1.442695
        %v905 = vpow.pop %v904
        %v906 = vmul.f32 %v884, 1.442695
        %v907 = vpow.pop %v906
        %v908 = vmul.f32 %v885, 1.442695
        %v909 = vpow.pop %v908
        %v910 = vmul.f32 %v886, 1.442695
        %v911 = vpow.pop %v910
        %v912 = vmul.f32 %v887, 1.442695
        %v913 = vpow.pop %v912
        %v914 = vmul.f32 %v888, 1.442695
        %v915 = vpow.pop %v914
        %v916 = vmul.f32 %v889, 1.442695
        %v917 = vpow.pop %v916
        %v918 = vmul.f32 %v890, 1.442695
        %v919 = vpow.pop %v918
        %v920 = vmul.f32 %v891, 1.442695
        %v921 = vpow.pop %v920
        %v922 = vmul.f32 %v892, 1.442695
        %v923 = vpow.pop %v922
        %v924 = vmul.f32 %v893, 1.442695
        %v925 = vpow.pop %v924
        %926 = vadd.xlane.f32.xlu0 %v895
        %v927 = vpop.xlane.xlu0 %926
        %928 = vadd.xlane.f32.xlu0 %v897
        %v929 = vpop.xlane.xlu0 %928
        %930 = vadd.xlane.f32.xlu0 %v899
        %v931 = vpop.xlane.xlu0 %930
        %932 = vadd.xlane.f32.xlu0 %v901
        %v933 = vpop.xlane.xlu0 %932
        %934 = vadd.xlane.f32.xlu0 %v903
        %v935 = vpop.xlane.xlu0 %934
        %936 = vadd.xlane.f32.xlu0 %v905
        %v937 = vpop.xlane.xlu0 %936
        %938 = vadd.xlane.f32.xlu0 %v907
        %v939 = vpop.xlane.xlu0 %938
        %940 = vadd.xlane.f32.xlu0 %v909
        %v941 = vpop.xlane.xlu0 %940
        %942 = vadd.xlane.f32.xlu0 %v911
        %v943 = vpop.xlane.xlu0 %942
        %944 = vadd.xlane.f32.xlu0 %v913
        %v945 = vpop.xlane.xlu0 %944
        %946 = vadd.xlane.f32.xlu0 %v915
        %v947 = vpop.xlane.xlu0 %946
        %948 = vadd.xlane.f32.xlu0 %v917
        %v949 = vpop.xlane.xlu0 %948
        %950 = vadd.xlane.f32.xlu0 %v919
        %v951 = vpop.xlane.xlu0 %950
        %952 = vadd.xlane.f32.xlu0 %v921
        %v953 = vpop.xlane.xlu0 %952
        %954 = vadd.xlane.f32.xlu0 %v923
        %v955 = vpop.xlane.xlu0 %954
        %956 = vadd.xlane.f32.xlu0 %v925
        %v957 = vpop.xlane.xlu0 %956
        %v958 = vrcp.pop %v927
        %v959 = vrcp.pop %v929
        %v960 = vrcp.pop %v931
        %v961 = vrcp.pop %v933
        %v962 = vrcp.pop %v935
        %v963 = vrcp.pop %v937
        %v964 = vrcp.pop %v939
        %v965 = vrcp.pop %v941
        %v966 = vrcp.pop %v943
        %v967 = vrcp.pop %v945
        %v968 = vrcp.pop %v947
        %v969 = vrcp.pop %v949
        %v970 = vrcp.pop %v951
        %v971 = vrcp.pop %v953
        %v972 = vrcp.pop %v955
        %v973 = vrcp.pop %v957
        %v974 = vmul.f32 %v895, %v958
        %v975 = vmul.f32 %v897, %v959
        %v976 = vmul.f32 %v899, %v960
        %v977 = vmul.f32 %v901, %v961
        %v978 = vmul.f32 %v903, %v962
        %v979 = vmul.f32 %v905, %v963
        %v980 = vmul.f32 %v907, %v964
        %v981 = vmul.f32 %v909, %v965
        %v982 = vmul.f32 %v911, %v966
        %v983 = vmul.f32 %v913, %v967
        %v984 = vmul.f32 %v915, %v968
        %v985 = vmul.f32 %v917, %v969
        %v986 = vmul.f32 %v919, %v970
        %v987 = vmul.f32 %v921, %v971
        %v988 = vmul.f32 %v923, %v972
        %v989 = vmul.f32 %v925, %v973
        %v990 = vpack.c.bf16 %v975, %v974
        %v991 = vpack.c.bf16 %v977, %v976
        %v992 = vpack.c.bf16 %v979, %v978
        %v993 = vpack.c.bf16 %v981, %v980
        %v994 = vpack.c.bf16 %v983, %v982
        %v995 = vpack.c.bf16 %v985, %v984
        %v996 = vpack.c.bf16 %v987, %v986
        %v997 = vpack.c.bf16 %v989, %v988
        %v1006 = vunpack.c.l.b16 %v990
        %v1007 = vunpack.c.h.b16 %v990
        %v1008 = vunpack.c.l.b16 %v991
        %v1009 = vunpack.c.h.b16 %v991
        %v1010 = vunpack.c.l.b16 %v992
        %v1011 = vunpack.c.h.b16 %v992
        %v1012 = vunpack.c.l.b16 %v993
        %v1013 = vunpack.c.h.b16 %v993
        %v1014 = vunpack.c.l.b16 %v994
        %v1015 = vunpack.c.h.b16 %v994
        %v1016 = vunpack.c.l.b16 %v995
        %v1017 = vunpack.c.h.b16 %v995
        %v1018 = vunpack.c.l.b16 %v996
        %v1019 = vunpack.c.h.b16 %v996
        %v1020 = vunpack.c.l.b16 %v997
        %v1021 = vunpack.c.h.b16 %v997
        %v1022 = vpack.c.b16 %v1006, %v1006
        %v1023 = vpack.c.b16 %v1007, %v1007
        %v1024 = vpack.c.b16 %v1008, %v1008
        %v1025 = vpack.c.b16 %v1009, %v1009
        %v1026 = vpack.c.b16 %v1010, %v1010
        %v1027 = vpack.c.b16 %v1011, %v1011
        %v1028 = vpack.c.b16 %v1012, %v1012
        %v1029 = vpack.c.b16 %v1013, %v1013
        %v1030 = vpack.c.b16 %v1014, %v1014
        %v1031 = vpack.c.b16 %v1015, %v1015
        %v1032 = vpack.c.b16 %v1016, %v1016
        %v1033 = vpack.c.b16 %v1017, %v1017
        %v1034 = vpack.c.b16 %v1018, %v1018
        %v1035 = vpack.c.b16 %v1019, %v1019
        %v1036 = vpack.c.b16 %v1020, %v1020
        %v1037 = vpack.c.b16 %v1021, %v1021
        %1054 = vst [vmem:[%s212] sm:$0xf] %v1022
        %1055 = vst [vmem:[%s212 + $0x4] sm:$0xf] %v1023
        %1056 = vst [vmem:[%s212 + $0x8] sm:$0xf] %v1024
        %1057 = vst [vmem:[%s212 + $0xc] sm:$0xf] %v1025
        %1058 = vst [vmem:[%s212 + $0x10] sm:$0xf] %v1026
        %1059 = vst [vmem:[%s212 + $0x14] sm:$0xf] %v1027
        %1060 = vst [vmem:[%s212 + $0x18] sm:$0xf] %v1028
        %1061 = vst [vmem:[%s212 + $0x1c] sm:$0xf] %v1029
        %1062 = vst [vmem:[%s212 + $0x20] sm:$0xf] %v1030
        %1063 = vst [vmem:[%s212 + $0x24] sm:$0xf] %v1031
        %1064 = vst [vmem:[%s212 + $0x28] sm:$0xf] %v1032
        %1065 = vst [vmem:[%s212 + $0x2c] sm:$0xf] %v1033
        %1066 = vst [vmem:[%s212 + $0x30] sm:$0xf] %v1034
        %1067 = vst [vmem:[%s212 + $0x34] sm:$0xf] %v1035
        %1068 = vst [vmem:[%s212 + $0x38] sm:$0xf] %v1036
        %1069 = vst [vmem:[%s212 + $0x3c] sm:$0xf] %v1037
        %v1070 = vld [vmem:[#allocation3] sm:$0xf]
        %v1071 = vld [vmem:[#allocation3 + $0x4] sm:$0xf]
        %v1072 = vld [vmem:[#allocation3 + $0x8] sm:$0xf]
        %v1073 = vld [vmem:[#allocation3 + $0xc] sm:$0xf]
        %v1074 = vld [vmem:[#allocation3 + $0x10] sm:$0xf]
        %v1075 = vld [vmem:[#allocation3 + $0x14] sm:$0xf]
        %v1076 = vld [vmem:[#allocation3 + $0x18] sm:$0xf]
        %v1077 = vld [vmem:[#allocation3 + $0x1c] sm:$0xf]
        %v1078 = vld [vmem:[#allocation3 + $0x20] sm:$0xf]
        %v1079 = vld [vmem:[#allocation3 + $0x24] sm:$0xf]
        %v1080 = vld [vmem:[#allocation3 + $0x28] sm:$0xf]
        %v1081 = vld [vmem:[#allocation3 + $0x2c] sm:$0xf]
        %v1082 = vld [vmem:[#allocation3 + $0x30] sm:$0xf]
        %v1083 = vld [vmem:[#allocation3 + $0x34] sm:$0xf]
        %v1084 = vld [vmem:[#allocation3 + $0x38] sm:$0xf]
        %v1085 = vld [vmem:[#allocation3 + $0x3c] sm:$0xf]
        %1086 = vrot.lane.b32.xlu0 %v652, 120
        %v1087 = vpop.permute.xlu0 %1086
        %1088 = vrot.lane.b32.xlu0 %v653, 120
        %v1089 = vpop.permute.xlu0 %1088
        %1090 = vrot.lane.b32.xlu0 %v654, 120
        %v1091 = vpop.permute.xlu0 %1090
        %1092 = vrot.lane.b32.xlu0 %v655, 120
        %v1093 = vpop.permute.xlu0 %1092
        %1094 = vrot.lane.b32.xlu0 %v656, 120
        %v1095 = vpop.permute.xlu0 %1094
        %1096 = vrot.lane.b32.xlu0 %v657, 120
        %v1097 = vpop.permute.xlu0 %1096
        %1098 = vrot.lane.b32.xlu0 %v658, 120
        %v1099 = vpop.permute.xlu0 %1098
        %1100 = vrot.lane.b32.xlu0 %v659, 120
        %v1101 = vpop.permute.xlu0 %1100
        %v1118 = vunpack.c.l.b16 %v1070
        %v1119 = vunpack.c.l.b16 %v1071
        %v1120 = vunpack.c.l.b16 %v1072
        %v1121 = vunpack.c.l.b16 %v1073
        %v1122 = vunpack.c.l.b16 %v1074
        %v1123 = vunpack.c.l.b16 %v1075
        %v1124 = vunpack.c.l.b16 %v1076
        %v1125 = vunpack.c.l.b16 %v1077
        %v1126 = vunpack.c.l.b16 %v1078
        %v1127 = vunpack.c.l.b16 %v1079
        %v1128 = vunpack.c.l.b16 %v1080
        %v1129 = vunpack.c.l.b16 %v1081
        %v1130 = vunpack.c.l.b16 %v1082
        %v1131 = vunpack.c.l.b16 %v1083
        %v1132 = vunpack.c.l.b16 %v1084
        %v1133 = vunpack.c.l.b16 %v1085
        %v1134 = vpack.c.b16 %v1119, %v1118
        %v1135 = vpack.c.b16 %v1121, %v1120
        %v1136 = vpack.c.b16 %v1123, %v1122
        %v1137 = vpack.c.b16 %v1125, %v1124
        %v1138 = vpack.c.b16 %v1127, %v1126
        %v1139 = vpack.c.b16 %v1129, %v1128
        %v1140 = vpack.c.b16 %v1131, %v1130
        %v1141 = vpack.c.b16 %v1133, %v1132
        %1142 = vrot.lane.b32.xlu0 %v1134, 120
        %v1143 = vpop.permute.xlu0 %1142
        %1144 = vrot.lane.b32.xlu0 %v1135, 120
        %v1145 = vpop.permute.xlu0 %1144
        %1146 = vrot.lane.b32.xlu0 %v1136, 120
        %v1147 = vpop.permute.xlu0 %1146
        %1148 = vrot.lane.b32.xlu0 %v1137, 120
        %v1149 = vpop.permute.xlu0 %1148
        %1150 = vrot.lane.b32.xlu0 %v1138, 120
        %v1151 = vpop.permute.xlu0 %1150
        %1152 = vrot.lane.b32.xlu0 %v1139, 120
        %v1153 = vpop.permute.xlu0 %1152
        %1154 = vrot.lane.b32.xlu0 %v1140, 120
        %v1155 = vpop.permute.xlu0 %1154
        %1156 = vrot.lane.b32.xlu0 %v1141, 120
        %v1157 = vpop.permute.xlu0 %1156
        %v1159 = vsel %vm700, %v1087, 0
        %v1162 = vsel %vm700, %v1089, 0
        %v1165 = vsel %vm700, %v1091, 0
        %v1168 = vsel %vm700, %v1093, 0
        %v1171 = vsel %vm700, %v1095, 0
        %v1174 = vsel %vm700, %v1097, 0
        %v1177 = vsel %vm700, %v1099, 0
        %v1180 = vsel %vm700, %v1101, 0
        %v1183 = vsel %vm700, %v1143, 0
        %v1186 = vsel %vm700, %v1145, 0
        %v1189 = vsel %vm700, %v1147, 0
        %v1192 = vsel %vm700, %v1149, 0
        %v1195 = vsel %vm700, %v1151, 0
        %v1198 = vsel %vm700, %v1153, 0
        %v1201 = vsel %vm700, %v1155, 0
        %v1204 = vsel %vm700, %v1157, 0
        %1206 = vmatprep.subr.bf16.mxu0 0
        %1207 = vmatpush1.bf16.xpose.msra.mxu0 %v1204
        %1208 = vmatprep.subr.bf16.mxu0 0
        %1209 = vmatpush1.bf16.xpose.msra.mxu0 %v1201
        %1210 = vmatprep.subr.bf16.mxu0 0
        %1211 = vmatpush1.bf16.xpose.msra.mxu0 %v1198
        %1212 = vmatprep.subr.bf16.mxu0 0
        %1213 = vmatpush1.bf16.xpose.msra.mxu0 %v1195
        %1214 = vmatprep.subr.bf16.mxu0 0
        %1215 = vmatpush1.bf16.xpose.msra.mxu0 %v1192
        %1216 = vmatprep.subr.bf16.mxu0 0
        %1217 = vmatpush1.bf16.xpose.msra.mxu0 %v1189
        %1218 = vmatprep.subr.bf16.mxu0 0
        %1219 = vmatpush1.bf16.xpose.msra.mxu0 %v1186
        %1220 = vmatprep.subr.bf16.mxu0 0
        %1221 = vmatpush1.bf16.xpose.msra.mxu0 %v1183
        %1222 = vmatprep.subr.bf16.mxu0 0
        %1223 = vmatpush2.bf16.xpose.msra.mxu0 0
        %1224 = vmatprep.subr.bf16.mxu0 0
        %1225 = vmatpush2.bf16.xpose.msra.mxu0 0
        %1226 = vmatprep.subr.bf16.mxu0 0
        %1227 = vmatpush2.bf16.xpose.msra.mxu0 0
        %1228 = vmatprep.subr.bf16.mxu0 0
        %1229 = vmatpush2.bf16.xpose.msra.mxu0 0
        %1230 = vmatprep.subr.bf16.mxu0 0
        %1231 = vmatpush2.bf16.xpose.msra.mxu0 0
        %1232 = vmatprep.subr.bf16.mxu0 0
        %1233 = vmatpush2.bf16.xpose.msra.mxu0 0
        %1234 = vmatprep.subr.bf16.mxu0 0
        %1235 = vmatpush2.bf16.xpose.msra.mxu0 0
        %1236 = vmatprep.subr.bf16.mxu0 0
        %1237 = vmatpush2.bf16.xpose.msra.mxu0 0
        %1238 = vmatprep.mubr.bf16.mxu0 0
        %1239 = vmatmul.mubr.bf16.gmra.mxu0 %v1159
        %v1240 = vpop.f32.mrf.mxu0
        %v1241 = vadd.f32 %v603, %v1240
        %v1242 = vpop.f32.mrf.mxu0
        %v1243 = vpop.f32.mrf.mxu0
        %v1244 = vadd.f32 %v603, %v1243
        %v1245 = vpop.f32.mrf.mxu0
        %1246 = vmatprep.mubr.bf16.mxu0 0
        %1247 = vmatmul.mubr.bf16.gmra.mxu0 %v1162
        %v1248 = vpop.f32.mrf.mxu0
        %v1249 = vadd.f32 %v603, %v1248
        %v1250 = vpop.f32.mrf.mxu0
        %v1251 = vpop.f32.mrf.mxu0
        %v1252 = vadd.f32 %v603, %v1251
        %v1253 = vpop.f32.mrf.mxu0
        %1254 = vmatprep.mubr.bf16.mxu0 0
        %1255 = vmatmul.mubr.bf16.gmra.mxu0 %v1165
        %v1256 = vpop.f32.mrf.mxu0
        %v1257 = vadd.f32 %v603, %v1256
        %v1258 = vpop.f32.mrf.mxu0
        %v1259 = vpop.f32.mrf.mxu0
        %v1260 = vadd.f32 %v603, %v1259
        %v1261 = vpop.f32.mrf.mxu0
        %1262 = vmatprep.mubr.bf16.mxu0 0
        %1263 = vmatmul.mubr.bf16.gmra.mxu0 %v1168
        %v1264 = vpop.f32.mrf.mxu0
        %v1265 = vadd.f32 %v603, %v1264
        %v1266 = vpop.f32.mrf.mxu0
        %v1267 = vpop.f32.mrf.mxu0
        %v1268 = vadd.f32 %v603, %v1267
        %v1269 = vpop.f32.mrf.mxu0
        %1270 = vmatprep.mubr.bf16.mxu0 0
        %1271 = vmatmul.mubr.bf16.gmra.mxu0 %v1171
        %v1272 = vpop.f32.mrf.mxu0
        %v1273 = vadd.f32 %v603, %v1272
        %v1274 = vpop.f32.mrf.mxu0
        %v1275 = vpop.f32.mrf.mxu0
        %v1276 = vadd.f32 %v603, %v1275
        %v1277 = vpop.f32.mrf.mxu0
        %1278 = vmatprep.mubr.bf16.mxu0 0
        %1279 = vmatmul.mubr.bf16.gmra.mxu0 %v1174
        %v1280 = vpop.f32.mrf.mxu0
        %v1281 = vadd.f32 %v603, %v1280
        %v1282 = vpop.f32.mrf.mxu0
        %v1283 = vpop.f32.mrf.mxu0
        %v1284 = vadd.f32 %v603, %v1283
        %v1285 = vpop.f32.mrf.mxu0
        %1286 = vmatprep.mubr.bf16.mxu0 0
        %1287 = vmatmul.mubr.bf16.gmra.mxu0 %v1177
        %v1288 = vpop.f32.mrf.mxu0
        %v1289 = vadd.f32 %v603, %v1288
        %v1290 = vpop.f32.mrf.mxu0
        %v1291 = vpop.f32.mrf.mxu0
        %v1292 = vadd.f32 %v603, %v1291
        %v1293 = vpop.f32.mrf.mxu0
        %1294 = vmatprep.mubr.bf16.mxu0 0
        %1295 = vmatmul.mubr.bf16.gmra.mxu0 %v1180
        %v1296 = vpop.f32.mrf.mxu0
        %v1297 = vadd.f32 %v603, %v1296
        %v1298 = vpop.f32.mrf.mxu0
        %v1299 = vpop.f32.mrf.mxu0
        %v1300 = vadd.f32 %v603, %v1299
        %v1301 = vpop.f32.mrf.mxu0
        %1302 = vdwg.mxu0
        %1303 = vmax.xlane.f32.xlu0 %v1241
        %v1304 = vpop.xlane.xlu0 %1303
        %1305 = vmax.xlane.f32.xlu0 %v1244
        %v1306 = vpop.xlane.xlu0 %1305
        %1307 = vmax.xlane.f32.xlu0 %v1249
        %v1308 = vpop.xlane.xlu0 %1307
        %1309 = vmax.xlane.f32.xlu0 %v1252
        %v1310 = vpop.xlane.xlu0 %1309
        %1311 = vmax.xlane.f32.xlu0 %v1257
        %v1312 = vpop.xlane.xlu0 %1311
        %1313 = vmax.xlane.f32.xlu0 %v1260
        %v1314 = vpop.xlane.xlu0 %1313
        %1315 = vmax.xlane.f32.xlu0 %v1265
        %v1316 = vpop.xlane.xlu0 %1315
        %1317 = vmax.xlane.f32.xlu0 %v1268
        %v1318 = vpop.xlane.xlu0 %1317
        %1319 = vmax.xlane.f32.xlu0 %v1273
        %v1320 = vpop.xlane.xlu0 %1319
        %1321 = vmax.xlane.f32.xlu0 %v1276
        %v1322 = vpop.xlane.xlu0 %1321
        %1323 = vmax.xlane.f32.xlu0 %v1281
        %v1324 = vpop.xlane.xlu0 %1323
        %1325 = vmax.xlane.f32.xlu0 %v1284
        %v1326 = vpop.xlane.xlu0 %1325
        %1327 = vmax.xlane.f32.xlu0 %v1289
        %v1328 = vpop.xlane.xlu0 %1327
        %1329 = vmax.xlane.f32.xlu0 %v1292
        %v1330 = vpop.xlane.xlu0 %1329
        %1331 = vmax.xlane.f32.xlu0 %v1297
        %v1332 = vpop.xlane.xlu0 %1331
        %1333 = vmax.xlane.f32.xlu0 %v1300
        %v1334 = vpop.xlane.xlu0 %1333
        %v1335 = vsub.f32 %v1241, %v1304
        %v1336 = vsub.f32 %v1244, %v1306
        %v1337 = vsub.f32 %v1249, %v1308
        %v1338 = vsub.f32 %v1252, %v1310
        %v1339 = vsub.f32 %v1257, %v1312
        %v1340 = vsub.f32 %v1260, %v1314
        %v1341 = vsub.f32 %v1265, %v1316
        %v1342 = vsub.f32 %v1268, %v1318
        %v1343 = vsub.f32 %v1273, %v1320
        %v1344 = vsub.f32 %v1276, %v1322
        %v1345 = vsub.f32 %v1281, %v1324
        %v1346 = vsub.f32 %v1284, %v1326
        %v1347 = vsub.f32 %v1289, %v1328
        %v1348 = vsub.f32 %v1292, %v1330
        %v1349 = vsub.f32 %v1297, %v1332
        %v1350 = vsub.f32 %v1300, %v1334
        %v1351 = vmul.f32 %v1335, 1.442695
        %v1352 = vpow.pop %v1351
        %v1353 = vmul.f32 %v1336, 1.442695
        %v1354 = vpow.pop %v1353
        %v1355 = vmul.f32 %v1337, 1.442695
        %v1356 = vpow.pop %v1355
        %v1357 = vmul.f32 %v1338, 1.442695
        %v1358 = vpow.pop %v1357
        %v1359 = vmul.f32 %v1339, 1.442695
        %v1360 = vpow.pop %v1359
        %v1361 = vmul.f32 %v1340, 1.442695
        %v1362 = vpow.pop %v1361
        %v1363 = vmul.f32 %v1341, 1.442695
        %v1364 = vpow.pop %v1363
        %v1365 = vmul.f32 %v1342, 1.442695
        %v1366 = vpow.pop %v1365
        %v1367 = vmul.f32 %v1343, 1.442695
        %v1368 = vpow.pop %v1367
        %v1369 = vmul.f32 %v1344, 1.442695
        %v1370 = vpow.pop %v1369
        %v1371 = vmul.f32 %v1345, 1.442695
        %v1372 = vpow.pop %v1371
        %v1373 = vmul.f32 %v1346, 1.442695
        %v1374 = vpow.pop %v1373
        %v1375 = vmul.f32 %v1347, 1.442695
        %v1376 = vpow.pop %v1375
        %v1377 = vmul.f32 %v1348, 1.442695
        %v1378 = vpow.pop %v1377
        %v1379 = vmul.f32 %v1349, 1.442695
        %v1380 = vpow.pop %v1379
        %v1381 = vmul.f32 %v1350, 1.442695
        %v1382 = vpow.pop %v1381
        %1383 = vadd.xlane.f32.xlu0 %v1352
        %v1384 = vpop.xlane.xlu0 %1383
        %1385 = vadd.xlane.f32.xlu0 %v1354
        %v1386 = vpop.xlane.xlu0 %1385
        %1387 = vadd.xlane.f32.xlu0 %v1356
        %v1388 = vpop.xlane.xlu0 %1387
        %1389 = vadd.xlane.f32.xlu0 %v1358
        %v1390 = vpop.xlane.xlu0 %1389
        %1391 = vadd.xlane.f32.xlu0 %v1360
        %v1392 = vpop.xlane.xlu0 %1391
        %1393 = vadd.xlane.f32.xlu0 %v1362
        %v1394 = vpop.xlane.xlu0 %1393
        %1395 = vadd.xlane.f32.xlu0 %v1364
        %v1396 = vpop.xlane.xlu0 %1395
        %1397 = vadd.xlane.f32.xlu0 %v1366
        %v1398 = vpop.xlane.xlu0 %1397
        %1399 = vadd.xlane.f32.xlu0 %v1368
        %v1400 = vpop.xlane.xlu0 %1399
        %1401 = vadd.xlane.f32.xlu0 %v1370
        %v1402 = vpop.xlane.xlu0 %1401
        %1403 = vadd.xlane.f32.xlu0 %v1372
        %v1404 = vpop.xlane.xlu0 %1403
        %1405 = vadd.xlane.f32.xlu0 %v1374
        %v1406 = vpop.xlane.xlu0 %1405
        %1407 = vadd.xlane.f32.xlu0 %v1376
        %v1408 = vpop.xlane.xlu0 %1407
        %1409 = vadd.xlane.f32.xlu0 %v1378
        %v1410 = vpop.xlane.xlu0 %1409
        %1411 = vadd.xlane.f32.xlu0 %v1380
        %v1412 = vpop.xlane.xlu0 %1411
        %1413 = vadd.xlane.f32.xlu0 %v1382
        %v1414 = vpop.xlane.xlu0 %1413
        %v1415 = vrcp.pop %v1384
        %v1416 = vrcp.pop %v1386
        %v1417 = vrcp.pop %v1388
        %v1418 = vrcp.pop %v1390
        %v1419 = vrcp.pop %v1392
        %v1420 = vrcp.pop %v1394
        %v1421 = vrcp.pop %v1396
        %v1422 = vrcp.pop %v1398
        %v1423 = vrcp.pop %v1400
        %v1424 = vrcp.pop %v1402
        %v1425 = vrcp.pop %v1404
        %v1426 = vrcp.pop %v1406
        %v1427 = vrcp.pop %v1408
        %v1428 = vrcp.pop %v1410
        %v1429 = vrcp.pop %v1412
        %v1430 = vrcp.pop %v1414
        %v1431 = vmul.f32 %v1352, %v1415
        %v1432 = vmul.f32 %v1354, %v1416
        %v1433 = vmul.f32 %v1356, %v1417
        %v1434 = vmul.f32 %v1358, %v1418
        %v1435 = vmul.f32 %v1360, %v1419
        %v1436 = vmul.f32 %v1362, %v1420
        %v1437 = vmul.f32 %v1364, %v1421
        %v1438 = vmul.f32 %v1366, %v1422
        %v1439 = vmul.f32 %v1368, %v1423
        %v1440 = vmul.f32 %v1370, %v1424
        %v1441 = vmul.f32 %v1372, %v1425
        %v1442 = vmul.f32 %v1374, %v1426
        %v1443 = vmul.f32 %v1376, %v1427
        %v1444 = vmul.f32 %v1378, %v1428
        %v1445 = vmul.f32 %v1380, %v1429
        %v1446 = vmul.f32 %v1382, %v1430
        %v1447 = vpack.c.bf16 %v1432, %v1431
        %v1448 = vpack.c.bf16 %v1434, %v1433
        %v1449 = vpack.c.bf16 %v1436, %v1435
        %v1450 = vpack.c.bf16 %v1438, %v1437
        %v1451 = vpack.c.bf16 %v1440, %v1439
        %v1452 = vpack.c.bf16 %v1442, %v1441
        %v1453 = vpack.c.bf16 %v1444, %v1443
        %v1454 = vpack.c.bf16 %v1446, %v1445
        %v1463 = vunpack.c.l.b16 %v1447
        %v1464 = vunpack.c.h.b16 %v1447
        %v1465 = vunpack.c.l.b16 %v1448
        %v1466 = vunpack.c.h.b16 %v1448
        %v1467 = vunpack.c.l.b16 %v1449
        %v1468 = vunpack.c.h.b16 %v1449
        %v1469 = vunpack.c.l.b16 %v1450
        %v1470 = vunpack.c.h.b16 %v1450
        %v1471 = vunpack.c.l.b16 %v1451
        %v1472 = vunpack.c.h.b16 %v1451
        %v1473 = vunpack.c.l.b16 %v1452
        %v1474 = vunpack.c.h.b16 %v1452
        %v1475 = vunpack.c.l.b16 %v1453
        %v1476 = vunpack.c.h.b16 %v1453
        %v1477 = vunpack.c.l.b16 %v1454
        %v1478 = vunpack.c.h.b16 %v1454
        %v1479 = vpack.c.b16 %v1463, %v1463
        %v1480 = vpack.c.b16 %v1464, %v1464
        %v1481 = vpack.c.b16 %v1465, %v1465
        %v1482 = vpack.c.b16 %v1466, %v1466
        %v1483 = vpack.c.b16 %v1467, %v1467
        %v1484 = vpack.c.b16 %v1468, %v1468
        %v1485 = vpack.c.b16 %v1469, %v1469
        %v1486 = vpack.c.b16 %v1470, %v1470
        %v1487 = vpack.c.b16 %v1471, %v1471
        %v1488 = vpack.c.b16 %v1472, %v1472
        %v1489 = vpack.c.b16 %v1473, %v1473
        %v1490 = vpack.c.b16 %v1474, %v1474
        %v1491 = vpack.c.b16 %v1475, %v1475
        %v1492 = vpack.c.b16 %v1476, %v1476
        %v1493 = vpack.c.b16 %v1477, %v1477
        %v1494 = vpack.c.b16 %v1478, %v1478
        %s1511 = scalar_lea.vmem %s212, 64 [#allocation4]
        %1512 = vst [vmem:[%s1511] sm:$0xf] %v1479
        %1513 = vst [vmem:[%s1511 + $0x4] sm:$0xf] %v1480
        %1514 = vst [vmem:[%s1511 + $0x8] sm:$0xf] %v1481
        %1515 = vst [vmem:[%s1511 + $0xc] sm:$0xf] %v1482
        %1516 = vst [vmem:[%s1511 + $0x10] sm:$0xf] %v1483
        %1517 = vst [vmem:[%s1511 + $0x14] sm:$0xf] %v1484
        %1518 = vst [vmem:[%s1511 + $0x18] sm:$0xf] %v1485
        %1519 = vst [vmem:[%s1511 + $0x1c] sm:$0xf] %v1486
        %1520 = vst [vmem:[%s1511 + $0x20] sm:$0xf] %v1487
        %1521 = vst [vmem:[%s1511 + $0x24] sm:$0xf] %v1488
        %1522 = vst [vmem:[%s1511 + $0x28] sm:$0xf] %v1489
        %1523 = vst [vmem:[%s1511 + $0x2c] sm:$0xf] %v1490
        %1524 = vst [vmem:[%s1511 + $0x30] sm:$0xf] %v1491
        %1525 = vst [vmem:[%s1511 + $0x34] sm:$0xf] %v1492
        %1526 = vst [vmem:[%s1511 + $0x38] sm:$0xf] %v1493
        %1527 = vst [vmem:[%s1511 + $0x3c] sm:$0xf] %v1494
        %v1528 = vld [vmem:[#allocation3] sm:$0xf]
        %v1529 = vld [vmem:[#allocation3 + $0x4] sm:$0xf]
        %v1530 = vld [vmem:[#allocation3 + $0x8] sm:$0xf]
        %v1531 = vld [vmem:[#allocation3 + $0xc] sm:$0xf]
        %v1532 = vld [vmem:[#allocation3 + $0x10] sm:$0xf]
        %v1533 = vld [vmem:[#allocation3 + $0x14] sm:$0xf]
        %v1534 = vld [vmem:[#allocation3 + $0x18] sm:$0xf]
        %v1535 = vld [vmem:[#allocation3 + $0x1c] sm:$0xf]
        %v1536 = vld [vmem:[#allocation3 + $0x20] sm:$0xf]
        %v1537 = vld [vmem:[#allocation3 + $0x24] sm:$0xf]
        %v1538 = vld [vmem:[#allocation3 + $0x28] sm:$0xf]
        %v1539 = vld [vmem:[#allocation3 + $0x2c] sm:$0xf]
        %v1540 = vld [vmem:[#allocation3 + $0x30] sm:$0xf]
        %v1541 = vld [vmem:[#allocation3 + $0x34] sm:$0xf]
        %v1542 = vld [vmem:[#allocation3 + $0x38] sm:$0xf]
        %v1543 = vld [vmem:[#allocation3 + $0x3c] sm:$0xf]
        %1544 = vrot.lane.b32.xlu0 %v652, 112
        %v1545 = vpop.permute.xlu0 %1544
        %1546 = vrot.lane.b32.xlu0 %v653, 112
        %v1547 = vpop.permute.xlu0 %1546
        %1548 = vrot.lane.b32.xlu0 %v654, 112
        %v1549 = vpop.permute.xlu0 %1548
        %1550 = vrot.lane.b32.xlu0 %v655, 112
        %v1551 = vpop.permute.xlu0 %1550
        %1552 = vrot.lane.b32.xlu0 %v656, 112
        %v1553 = vpop.permute.xlu0 %1552
        %1554 = vrot.lane.b32.xlu0 %v657, 112
        %v1555 = vpop.permute.xlu0 %1554
        %1556 = vrot.lane.b32.xlu0 %v658, 112
        %v1557 = vpop.permute.xlu0 %1556
        %1558 = vrot.lane.b32.xlu0 %v659, 112
        %v1559 = vpop.permute.xlu0 %1558
        %v1576 = vunpack.c.l.b16 %v1528
        %v1577 = vunpack.c.l.b16 %v1529
        %v1578 = vunpack.c.l.b16 %v1530
        %v1579 = vunpack.c.l.b16 %v1531
        %v1580 = vunpack.c.l.b16 %v1532
        %v1581 = vunpack.c.l.b16 %v1533
        %v1582 = vunpack.c.l.b16 %v1534
        %v1583 = vunpack.c.l.b16 %v1535
        %v1584 = vunpack.c.l.b16 %v1536
        %v1585 = vunpack.c.l.b16 %v1537
        %v1586 = vunpack.c.l.b16 %v1538
        %v1587 = vunpack.c.l.b16 %v1539
        %v1588 = vunpack.c.l.b16 %v1540
        %v1589 = vunpack.c.l.b16 %v1541
        %v1590 = vunpack.c.l.b16 %v1542
        %v1591 = vunpack.c.l.b16 %v1543
        %v1592 = vpack.c.b16 %v1577, %v1576
        %v1593 = vpack.c.b16 %v1579, %v1578
        %v1594 = vpack.c.b16 %v1581, %v1580
        %v1595 = vpack.c.b16 %v1583, %v1582
        %v1596 = vpack.c.b16 %v1585, %v1584
        %v1597 = vpack.c.b16 %v1587, %v1586
        %v1598 = vpack.c.b16 %v1589, %v1588
        %v1599 = vpack.c.b16 %v1591, %v1590
        %1600 = vrot.lane.b32.xlu0 %v1592, 112
        %v1601 = vpop.permute.xlu0 %1600
        %1602 = vrot.lane.b32.xlu0 %v1593, 112
        %v1603 = vpop.permute.xlu0 %1602
        %1604 = vrot.lane.b32.xlu0 %v1594, 112
        %v1605 = vpop.permute.xlu0 %1604
        %1606 = vrot.lane.b32.xlu0 %v1595, 112
        %v1607 = vpop.permute.xlu0 %1606
        %1608 = vrot.lane.b32.xlu0 %v1596, 112
        %v1609 = vpop.permute.xlu0 %1608
        %1610 = vrot.lane.b32.xlu0 %v1597, 112
        %v1611 = vpop.permute.xlu0 %1610
        %1612 = vrot.lane.b32.xlu0 %v1598, 112
        %v1613 = vpop.permute.xlu0 %1612
        %1614 = vrot.lane.b32.xlu0 %v1599, 112
        %v1615 = vpop.permute.xlu0 %1614
        %v1617 = vsel %vm700, %v1545, 0
        %v1620 = vsel %vm700, %v1547, 0
        %v1623 = vsel %vm700, %v1549, 0
        %v1626 = vsel %vm700, %v1551, 0
        %v1629 = vsel %vm700, %v1553, 0
        %v1632 = vsel %vm700, %v1555, 0
        %v1635 = vsel %vm700, %v1557, 0
        %v1638 = vsel %vm700, %v1559, 0
        %v1641 = vsel %vm700, %v1601, 0
        %v1644 = vsel %vm700, %v1603, 0
        %v1647 = vsel %vm700, %v1605, 0
        %v1650 = vsel %vm700, %v1607, 0
        %v1653 = vsel %vm700, %v1609, 0
        %v1656 = vsel %vm700, %v1611, 0
        %v1659 = vsel %vm700, %v1613, 0
        %v1662 = vsel %vm700, %v1615, 0
        %1664 = vmatprep.subr.bf16.mxu0 0
        %1665 = vmatpush1.bf16.xpose.msra.mxu0 %v1662
        %1666 = vmatprep.subr.bf16.mxu0 0
        %1667 = vmatpush1.bf16.xpose.msra.mxu0 %v1659
        %1668 = vmatprep.subr.bf16.mxu0 0
        %1669 = vmatpush1.bf16.xpose.msra.mxu0 %v1656
        %1670 = vmatprep.subr.bf16.mxu0 0
        %1671 = vmatpush1.bf16.xpose.msra.mxu0 %v1653
        %1672 = vmatprep.subr.bf16.mxu0 0
        %1673 = vmatpush1.bf16.xpose.msra.mxu0 %v1650
        %1674 = vmatprep.subr.bf16.mxu0 0
        %1675 = vmatpush1.bf16.xpose.msra.mxu0 %v1647
        %1676 = vmatprep.subr.bf16.mxu0 0
        %1677 = vmatpush1.bf16.xpose.msra.mxu0 %v1644
        %1678 = vmatprep.subr.bf16.mxu0 0
        %1679 = vmatpush1.bf16.xpose.msra.mxu0 %v1641
        %1680 = vmatprep.subr.bf16.mxu0 0
        %1681 = vmatpush2.bf16.xpose.msra.mxu0 0
        %1682 = vmatprep.subr.bf16.mxu0 0
        %1683 = vmatpush2.bf16.xpose.msra.mxu0 0
        %1684 = vmatprep.subr.bf16.mxu0 0
        %1685 = vmatpush2.bf16.xpose.msra.mxu0 0
        %1686 = vmatprep.subr.bf16.mxu0 0
        %1687 = vmatpush2.bf16.xpose.msra.mxu0 0
        %1688 = vmatprep.subr.bf16.mxu0 0
        %1689 = vmatpush2.bf16.xpose.msra.mxu0 0
        %1690 = vmatprep.subr.bf16.mxu0 0
        %1691 = vmatpush2.bf16.xpose.msra.mxu0 0
        %1692 = vmatprep.subr.bf16.mxu0 0
        %1693 = vmatpush2.bf16.xpose.msra.mxu0 0
        %1694 = vmatprep.subr.bf16.mxu0 0
        %1695 = vmatpush2.bf16.xpose.msra.mxu0 0
        %1696 = vmatprep.mubr.bf16.mxu0 0
        %1697 = vmatmul.mubr.bf16.gmra.mxu0 %v1617
        %v1698 = vpop.f32.mrf.mxu0
        %v1699 = vadd.f32 %v603, %v1698
        %v1700 = vpop.f32.mrf.mxu0
        %v1701 = vpop.f32.mrf.mxu0
        %v1702 = vadd.f32 %v603, %v1701
        %v1703 = vpop.f32.mrf.mxu0
        %1704 = vmatprep.mubr.bf16.mxu0 0
        %1705 = vmatmul.mubr.bf16.gmra.mxu0 %v1620
        %v1706 = vpop.f32.mrf.mxu0
        %v1707 = vadd.f32 %v603, %v1706
        %v1708 = vpop.f32.mrf.mxu0
        %v1709 = vpop.f32.mrf.mxu0
        %v1710 = vadd.f32 %v603, %v1709
        %v1711 = vpop.f32.mrf.mxu0
        %1712 = vmatprep.mubr.bf16.mxu0 0
        %1713 = vmatmul.mubr.bf16.gmra.mxu0 %v1623
        %v1714 = vpop.f32.mrf.mxu0
        %v1715 = vadd.f32 %v603, %v1714
        %v1716 = vpop.f32.mrf.mxu0
        %v1717 = vpop.f32.mrf.mxu0
        %v1718 = vadd.f32 %v603, %v1717
        %v1719 = vpop.f32.mrf.mxu0
        %1720 = vmatprep.mubr.bf16.mxu0 0
        %1721 = vmatmul.mubr.bf16.gmra.mxu0 %v1626
        %v1722 = vpop.f32.mrf.mxu0
        %v1723 = vadd.f32 %v603, %v1722
        %v1724 = vpop.f32.mrf.mxu0
        %v1725 = vpop.f32.mrf.mxu0
        %v1726 = vadd.f32 %v603, %v1725
        %v1727 = vpop.f32.mrf.mxu0
        %1728 = vmatprep.mubr.bf16.mxu0 0
        %1729 = vmatmul.mubr.bf16.gmra.mxu0 %v1629
        %v1730 = vpop.f32.mrf.mxu0
        %v1731 = vadd.f32 %v603, %v1730
        %v1732 = vpop.f32.mrf.mxu0
        %v1733 = vpop.f32.mrf.mxu0
        %v1734 = vadd.f32 %v603, %v1733
        %v1735 = vpop.f32.mrf.mxu0
        %1736 = vmatprep.mubr.bf16.mxu0 0
        %1737 = vmatmul.mubr.bf16.gmra.mxu0 %v1632
        %v1738 = vpop.f32.mrf.mxu0
        %v1739 = vadd.f32 %v603, %v1738
        %v1740 = vpop.f32.mrf.mxu0
        %v1741 = vpop.f32.mrf.mxu0
        %v1742 = vadd.f32 %v603, %v1741
        %v1743 = vpop.f32.mrf.mxu0
        %1744 = vmatprep.mubr.bf16.mxu0 0
        %1745 = vmatmul.mubr.bf16.gmra.mxu0 %v1635
        %v1746 = vpop.f32.mrf.mxu0
        %v1747 = vadd.f32 %v603, %v1746
        %v1748 = vpop.f32.mrf.mxu0
        %v1749 = vpop.f32.mrf.mxu0
        %v1750 = vadd.f32 %v603, %v1749
        %v1751 = vpop.f32.mrf.mxu0
        %1752 = vmatprep.mubr.bf16.mxu0 0
        %1753 = vmatmul.mubr.bf16.gmra.mxu0 %v1638
        %v1754 = vpop.f32.mrf.mxu0
        %v1755 = vadd.f32 %v603, %v1754
        %v1756 = vpop.f32.mrf.mxu0
        %v1757 = vpop.f32.mrf.mxu0
        %v1758 = vadd.f32 %v603, %v1757
        %v1759 = vpop.f32.mrf.mxu0
        %1760 = vdwg.mxu0
        %1761 = vmax.xlane.f32.xlu0 %v1699
        %v1762 = vpop.xlane.xlu0 %1761
        %1763 = vmax.xlane.f32.xlu0 %v1702
        %v1764 = vpop.xlane.xlu0 %1763
        %1765 = vmax.xlane.f32.xlu0 %v1707
        %v1766 = vpop.xlane.xlu0 %1765
        %1767 = vmax.xlane.f32.xlu0 %v1710
        %v1768 = vpop.xlane.xlu0 %1767
        %1769 = vmax.xlane.f32.xlu0 %v1715
        %v1770 = vpop.xlane.xlu0 %1769
        %1771 = vmax.xlane.f32.xlu0 %v1718
        %v1772 = vpop.xlane.xlu0 %1771
        %1773 = vmax.xlane.f32.xlu0 %v1723
        %v1774 = vpop.xlane.xlu0 %1773
        %1775 = vmax.xlane.f32.xlu0 %v1726
        %v1776 = vpop.xlane.xlu0 %1775
        %1777 = vmax.xlane.f32.xlu0 %v1731
        %v1778 = vpop.xlane.xlu0 %1777
        %1779 = vmax.xlane.f32.xlu0 %v1734
        %v1780 = vpop.xlane.xlu0 %1779
        %1781 = vmax.xlane.f32.xlu0 %v1739
        %v1782 = vpop.xlane.xlu0 %1781
        %1783 = vmax.xlane.f32.xlu0 %v1742
        %v1784 = vpop.xlane.xlu0 %1783
        %1785 = vmax.xlane.f32.xlu0 %v1747
        %v1786 = vpop.xlane.xlu0 %1785
        %1787 = vmax.xlane.f32.xlu0 %v1750
        %v1788 = vpop.xlane.xlu0 %1787
        %1789 = vmax.xlane.f32.xlu0 %v1755
        %v1790 = vpop.xlane.xlu0 %1789
        %1791 = vmax.xlane.f32.xlu0 %v1758
        %v1792 = vpop.xlane.xlu0 %1791
        %v1793 = vsub.f32 %v1699, %v1762
        %v1794 = vsub.f32 %v1702, %v1764
        %v1795 = vsub.f32 %v1707, %v1766
        %v1796 = vsub.f32 %v1710, %v1768
        %v1797 = vsub.f32 %v1715, %v1770
        %v1798 = vsub.f32 %v1718, %v1772
        %v1799 = vsub.f32 %v1723, %v1774
        %v1800 = vsub.f32 %v1726, %v1776
        %v1801 = vsub.f32 %v1731, %v1778
        %v1802 = vsub.f32 %v1734, %v1780
        %v1803 = vsub.f32 %v1739, %v1782
        %v1804 = vsub.f32 %v1742, %v1784
        %v1805 = vsub.f32 %v1747, %v1786
        %v1806 = vsub.f32 %v1750, %v1788
        %v1807 = vsub.f32 %v1755, %v1790
        %v1808 = vsub.f32 %v1758, %v1792
        %v1809 = vmul.f32 %v1793, 1.442695
        %v1810 = vpow.pop %v1809
        %v1811 = vmul.f32 %v1794, 1.442695
        %v1812 = vpow.pop %v1811
        %v1813 = vmul.f32 %v1795, 1.442695
        %v1814 = vpow.pop %v1813
        %v1815 = vmul.f32 %v1796, 1.442695
        %v1816 = vpow.pop %v1815
        %v1817 = vmul.f32 %v1797, 1.442695
        %v1818 = vpow.pop %v1817
        %v1819 = vmul.f32 %v1798, 1.442695
        %v1820 = vpow.pop %v1819
        %v1821 = vmul.f32 %v1799, 1.442695
        %v1822 = vpow.pop %v1821
        %v1823 = vmul.f32 %v1800, 1.442695
        %v1824 = vpow.pop %v1823
        %v1825 = vmul.f32 %v1801, 1.442695
        %v1826 = vpow.pop %v1825
        %v1827 = vmul.f32 %v1802, 1.442695
        %v1828 = vpow.pop %v1827
        %v1829 = vmul.f32 %v1803, 1.442695
        %v1830 = vpow.pop %v1829
        %v1831 = vmul.f32 %v1804, 1.442695
        %v1832 = vpow.pop %v1831
        %v1833 = vmul.f32 %v1805, 1.442695
        %v1834 = vpow.pop %v1833
        %v1835 = vmul.f32 %v1806, 1.442695
        %v1836 = vpow.pop %v1835
        %v1837 = vmul.f32 %v1807, 1.442695
        %v1838 = vpow.pop %v1837
        %v1839 = vmul.f32 %v1808, 1.442695
        %v1840 = vpow.pop %v1839
        %1841 = vadd.xlane.f32.xlu0 %v1810
        %v1842 = vpop.xlane.xlu0 %1841
        %1843 = vadd.xlane.f32.xlu0 %v1812
        %v1844 = vpop.xlane.xlu0 %1843
        %1845 = vadd.xlane.f32.xlu0 %v1814
        %v1846 = vpop.xlane.xlu0 %1845
        %1847 = vadd.xlane.f32.xlu0 %v1816
        %v1848 = vpop.xlane.xlu0 %1847
        %1849 = vadd.xlane.f32.xlu0 %v1818
        %v1850 = vpop.xlane.xlu0 %1849
        %1851 = vadd.xlane.f32.xlu0 %v1820
        %v1852 = vpop.xlane.xlu0 %1851
        %1853 = vadd.xlane.f32.xlu0 %v1822
        %v1854 = vpop.xlane.xlu0 %1853
        %1855 = vadd.xlane.f32.xlu0 %v1824
        %v1856 = vpop.xlane.xlu0 %1855
        %1857 = vadd.xlane.f32.xlu0 %v1826
        %v1858 = vpop.xlane.xlu0 %1857
        %1859 = vadd.xlane.f32.xlu0 %v1828
        %v1860 = vpop.xlane.xlu0 %1859
        %1861 = vadd.xlane.f32.xlu0 %v1830
        %v1862 = vpop.xlane.xlu0 %1861
        %1863 = vadd.xlane.f32.xlu0 %v1832
        %v1864 = vpop.xlane.xlu0 %1863
        %1865 = vadd.xlane.f32.xlu0 %v1834
        %v1866 = vpop.xlane.xlu0 %1865
        %1867 = vadd.xlane.f32.xlu0 %v1836
        %v1868 = vpop.xlane.xlu0 %1867
        %1869 = vadd.xlane.f32.xlu0 %v1838
        %v1870 = vpop.xlane.xlu0 %1869
        %1871 = vadd.xlane.f32.xlu0 %v1840
        %v1872 = vpop.xlane.xlu0 %1871
        %v1873 = vrcp.pop %v1842
        %v1874 = vrcp.pop %v1844
        %v1875 = vrcp.pop %v1846
        %v1876 = vrcp.pop %v1848
        %v1877 = vrcp.pop %v1850
        %v1878 = vrcp.pop %v1852
        %v1879 = vrcp.pop %v1854
        %v1880 = vrcp.pop %v1856
        %v1881 = vrcp.pop %v1858
        %v1882 = vrcp.pop %v1860
        %v1883 = vrcp.pop %v1862
        %v1884 = vrcp.pop %v1864
        %v1885 = vrcp.pop %v1866
        %v1886 = vrcp.pop %v1868
        %v1887 = vrcp.pop %v1870
        %v1888 = vrcp.pop %v1872
        %v1889 = vmul.f32 %v1810, %v1873
        %v1890 = vmul.f32 %v1812, %v1874
        %v1891 = vmul.f32 %v1814, %v1875
        %v1892 = vmul.f32 %v1816, %v1876
        %v1893 = vmul.f32 %v1818, %v1877
        %v1894 = vmul.f32 %v1820, %v1878
        %v1895 = vmul.f32 %v1822, %v1879
        %v1896 = vmul.f32 %v1824, %v1880
        %v1897 = vmul.f32 %v1826, %v1881
        %v1898 = vmul.f32 %v1828, %v1882
        %v1899 = vmul.f32 %v1830, %v1883
        %v1900 = vmul.f32 %v1832, %v1884
        %v1901 = vmul.f32 %v1834, %v1885
        %v1902 = vmul.f32 %v1836, %v1886
        %v1903 = vmul.f32 %v1838, %v1887
        %v1904 = vmul.f32 %v1840, %v1888
        %v1905 = vpack.c.bf16 %v1890, %v1889
        %v1906 = vpack.c.bf16 %v1892, %v1891
        %v1907 = vpack.c.bf16 %v1894, %v1893
        %v1908 = vpack.c.bf16 %v1896, %v1895
        %v1909 = vpack.c.bf16 %v1898, %v1897
        %v1910 = vpack.c.bf16 %v1900, %v1899
        %v1911 = vpack.c.bf16 %v1902, %v1901
        %v1912 = vpack.c.bf16 %v1904, %v1903
        %v1921 = vunpack.c.l.b16 %v1905
        %v1922 = vunpack.c.h.b16 %v1905
        %v1923 = vunpack.c.l.b16 %v1906
        %v1924 = vunpack.c.h.b16 %v1906
        %v1925 = vunpack.c.l.b16 %v1907
        %v1926 = vunpack.c.h.b16 %v1907
        %v1927 = vunpack.c.l.b16 %v1908
        %v1928 = vunpack.c.h.b16 %v1908
        %v1929 = vunpack.c.l.b16 %v1909
        %v1930 = vunpack.c.h.b16 %v1909
        %v1931 = vunpack.c.l.b16 %v1910
        %v1932 = vunpack.c.h.b16 %v1910
        %v1933 = vunpack.c.l.b16 %v1911
        %v1934 = vunpack.c.h.b16 %v1911
        %v1935 = vunpack.c.l.b16 %v1912
        %v1936 = vunpack.c.h.b16 %v1912
        %v1937 = vpack.c.b16 %v1921, %v1921
        %v1938 = vpack.c.b16 %v1922, %v1922
        %v1939 = vpack.c.b16 %v1923, %v1923
        %v1940 = vpack.c.b16 %v1924, %v1924
        %v1941 = vpack.c.b16 %v1925, %v1925
        %v1942 = vpack.c.b16 %v1926, %v1926
        %v1943 = vpack.c.b16 %v1927, %v1927
        %v1944 = vpack.c.b16 %v1928, %v1928
        %v1945 = vpack.c.b16 %v1929, %v1929
        %v1946 = vpack.c.b16 %v1930, %v1930
        %v1947 = vpack.c.b16 %v1931, %v1931
        %v1948 = vpack.c.b16 %v1932, %v1932
        %v1949 = vpack.c.b16 %v1933, %v1933
        %v1950 = vpack.c.b16 %v1934, %v1934
        %v1951 = vpack.c.b16 %v1935, %v1935
        %v1952 = vpack.c.b16 %v1936, %v1936
        %s1969 = scalar_lea.vmem %s212, 128 [#allocation4]
        %1970 = vst [vmem:[%s1969] sm:$0xf] %v1937
        %1971 = vst [vmem:[%s1969 + $0x4] sm:$0xf] %v1938
        %1972 = vst [vmem:[%s1969 + $0x8] sm:$0xf] %v1939
        %1973 = vst [vmem:[%s1969 + $0xc] sm:$0xf] %v1940
        %1974 = vst [vmem:[%s1969 + $0x10] sm:$0xf] %v1941
        %1975 = vst [vmem:[%s1969 + $0x14] sm:$0xf] %v1942
        %1976 = vst [vmem:[%s1969 + $0x18] sm:$0xf] %v1943
        %1977 = vst [vmem:[%s1969 + $0x1c] sm:$0xf] %v1944
        %1978 = vst [vmem:[%s1969 + $0x20] sm:$0xf] %v1945
        %1979 = vst [vmem:[%s1969 + $0x24] sm:$0xf] %v1946
        %1980 = vst [vmem:[%s1969 + $0x28] sm:$0xf] %v1947
        %1981 = vst [vmem:[%s1969 + $0x2c] sm:$0xf] %v1948
        %1982 = vst [vmem:[%s1969 + $0x30] sm:$0xf] %v1949
        %1983 = vst [vmem:[%s1969 + $0x34] sm:$0xf] %v1950
        %1984 = vst [vmem:[%s1969 + $0x38] sm:$0xf] %v1951
        %1985 = vst [vmem:[%s1969 + $0x3c] sm:$0xf] %v1952
        %v1986 = vld [vmem:[#allocation3] sm:$0xf]
        %v1987 = vld [vmem:[#allocation3 + $0x4] sm:$0xf]
        %v1988 = vld [vmem:[#allocation3 + $0x8] sm:$0xf]
        %v1989 = vld [vmem:[#allocation3 + $0xc] sm:$0xf]
        %v1990 = vld [vmem:[#allocation3 + $0x10] sm:$0xf]
        %v1991 = vld [vmem:[#allocation3 + $0x14] sm:$0xf]
        %v1992 = vld [vmem:[#allocation3 + $0x18] sm:$0xf]
        %v1993 = vld [vmem:[#allocation3 + $0x1c] sm:$0xf]
        %v1994 = vld [vmem:[#allocation3 + $0x20] sm:$0xf]
        %v1995 = vld [vmem:[#allocation3 + $0x24] sm:$0xf]
        %v1996 = vld [vmem:[#allocation3 + $0x28] sm:$0xf]
        %v1997 = vld [vmem:[#allocation3 + $0x2c] sm:$0xf]
        %v1998 = vld [vmem:[#allocation3 + $0x30] sm:$0xf]
        %v1999 = vld [vmem:[#allocation3 + $0x34] sm:$0xf]
        %v2000 = vld [vmem:[#allocation3 + $0x38] sm:$0xf]
        %v2001 = vld [vmem:[#allocation3 + $0x3c] sm:$0xf]
        %2002 = vrot.lane.b32.xlu0 %v652, 104
        %v2003 = vpop.permute.xlu0 %2002
        %2004 = vrot.lane.b32.xlu0 %v653, 104
        %v2005 = vpop.permute.xlu0 %2004
        %2006 = vrot.lane.b32.xlu0 %v654, 104
        %v2007 = vpop.permute.xlu0 %2006
        %2008 = vrot.lane.b32.xlu0 %v655, 104
        %v2009 = vpop.permute.xlu0 %2008
        %2010 = vrot.lane.b32.xlu0 %v656, 104
        %v2011 = vpop.permute.xlu0 %2010
        %2012 = vrot.lane.b32.xlu0 %v657, 104
        %v2013 = vpop.permute.xlu0 %2012
        %2014 = vrot.lane.b32.xlu0 %v658, 104
        %v2015 = vpop.permute.xlu0 %2014
        %2016 = vrot.lane.b32.xlu0 %v659, 104
        %v2017 = vpop.permute.xlu0 %2016
        %v2034 = vunpack.c.l.b16 %v1986
        %v2035 = vunpack.c.l.b16 %v1987
        %v2036 = vunpack.c.l.b16 %v1988
        %v2037 = vunpack.c.l.b16 %v1989
        %v2038 = vunpack.c.l.b16 %v1990
        %v2039 = vunpack.c.l.b16 %v1991
        %v2040 = vunpack.c.l.b16 %v1992
        %v2041 = vunpack.c.l.b16 %v1993
        %v2042 = vunpack.c.l.b16 %v1994
        %v2043 = vunpack.c.l.b16 %v1995
        %v2044 = vunpack.c.l.b16 %v1996
        %v2045 = vunpack.c.l.b16 %v1997
        %v2046 = vunpack.c.l.b16 %v1998
        %v2047 = vunpack.c.l.b16 %v1999
        %v2048 = vunpack.c.l.b16 %v2000
        %v2049 = vunpack.c.l.b16 %v2001
        %v2050 = vpack.c.b16 %v2035, %v2034
        %v2051 = vpack.c.b16 %v2037, %v2036
        %v2052 = vpack.c.b16 %v2039, %v2038
        %v2053 = vpack.c.b16 %v2041, %v2040
        %v2054 = vpack.c.b16 %v2043, %v2042
        %v2055 = vpack.c.b16 %v2045, %v2044
        %v2056 = vpack.c.b16 %v2047, %v2046
        %v2057 = vpack.c.b16 %v2049, %v2048
        %2058 = vrot.lane.b32.xlu0 %v2050, 104
        %v2059 = vpop.permute.xlu0 %2058
        %2060 = vrot.lane.b32.xlu0 %v2051, 104
        %v2061 = vpop.permute.xlu0 %2060
        %2062 = vrot.lane.b32.xlu0 %v2052, 104
        %v2063 = vpop.permute.xlu0 %2062
        %2064 = vrot.lane.b32.xlu0 %v2053, 104
        %v2065 = vpop.permute.xlu0 %2064
        %2066 = vrot.lane.b32.xlu0 %v2054, 104
        %v2067 = vpop.permute.xlu0 %2066
        %2068 = vrot.lane.b32.xlu0 %v2055, 104
        %v2069 = vpop.permute.xlu0 %2068
        %2070 = vrot.lane.b32.xlu0 %v2056, 104
        %v2071 = vpop.permute.xlu0 %2070
        %2072 = vrot.lane.b32.xlu0 %v2057, 104
        %v2073 = vpop.permute.xlu0 %2072
        %v2075 = vsel %vm700, %v2003, 0
        %v2078 = vsel %vm700, %v2005, 0
        %v2081 = vsel %vm700, %v2007, 0
        %v2084 = vsel %vm700, %v2009, 0
        %v2087 = vsel %vm700, %v2011, 0
        %v2090 = vsel %vm700, %v2013, 0
        %v2093 = vsel %vm700, %v2015, 0
        %v2096 = vsel %vm700, %v2017, 0
        %v2099 = vsel %vm700, %v2059, 0
        %v2102 = vsel %vm700, %v2061, 0
        %v2105 = vsel %vm700, %v2063, 0
        %v2108 = vsel %vm700, %v2065, 0
        %v2111 = vsel %vm700, %v2067, 0
        %v2114 = vsel %vm700, %v2069, 0
        %v2117 = vsel %vm700, %v2071, 0
        %v2120 = vsel %vm700, %v2073, 0
        %2122 = vmatprep.subr.bf16.mxu0 0
        %2123 = vmatpush1.bf16.xpose.msra.mxu0 %v2120
        %2124 = vmatprep.subr.bf16.mxu0 0
        %2125 = vmatpush1.bf16.xpose.msra.mxu0 %v2117
        %2126 = vmatprep.subr.bf16.mxu0 0
        %2127 = vmatpush1.bf16.xpose.msra.mxu0 %v2114
        %2128 = vmatprep.subr.bf16.mxu0 0
        %2129 = vmatpush1.bf16.xpose.msra.mxu0 %v2111
        %2130 = vmatprep.subr.bf16.mxu0 0
        %2131 = vmatpush1.bf16.xpose.msra.mxu0 %v2108
        %2132 = vmatprep.subr.bf16.mxu0 0
        %2133 = vmatpush1.bf16.xpose.msra.mxu0 %v2105
        %2134 = vmatprep.subr.bf16.mxu0 0
        %2135 = vmatpush1.bf16.xpose.msra.mxu0 %v2102
        %2136 = vmatprep.subr.bf16.mxu0 0
        %2137 = vmatpush1.bf16.xpose.msra.mxu0 %v2099
        %2138 = vmatprep.subr.bf16.mxu0 0
        %2139 = vmatpush2.bf16.xpose.msra.mxu0 0
        %2140 = vmatprep.subr.bf16.mxu0 0
        %2141 = vmatpush2.bf16.xpose.msra.mxu0 0
        %2142 = vmatprep.subr.bf16.mxu0 0
        %2143 = vmatpush2.bf16.xpose.msra.mxu0 0
        %2144 = vmatprep.subr.bf16.mxu0 0
        %2145 = vmatpush2.bf16.xpose.msra.mxu0 0
        %2146 = vmatprep.subr.bf16.mxu0 0
        %2147 = vmatpush2.bf16.xpose.msra.mxu0 0
        %2148 = vmatprep.subr.bf16.mxu0 0
        %2149 = vmatpush2.bf16.xpose.msra.mxu0 0
        %2150 = vmatprep.subr.bf16.mxu0 0
        %2151 = vmatpush2.bf16.xpose.msra.mxu0 0
        %2152 = vmatprep.subr.bf16.mxu0 0
        %2153 = vmatpush2.bf16.xpose.msra.mxu0 0
        %2154 = vmatprep.mubr.bf16.mxu0 0
        %2155 = vmatmul.mubr.bf16.gmra.mxu0 %v2075
        %v2156 = vpop.f32.mrf.mxu0
        %v2157 = vadd.f32 %v603, %v2156
        %v2158 = vpop.f32.mrf.mxu0
        %v2159 = vpop.f32.mrf.mxu0
        %v2160 = vadd.f32 %v603, %v2159
        %v2161 = vpop.f32.mrf.mxu0
        %2162 = vmatprep.mubr.bf16.mxu0 0
        %2163 = vmatmul.mubr.bf16.gmra.mxu0 %v2078
        %v2164 = vpop.f32.mrf.mxu0
        %v2165 = vadd.f32 %v603, %v2164
        %v2166 = vpop.f32.mrf.mxu0
        %v2167 = vpop.f32.mrf.mxu0
        %v2168 = vadd.f32 %v603, %v2167
        %v2169 = vpop.f32.mrf.mxu0
        %2170 = vmatprep.mubr.bf16.mxu0 0
        %2171 = vmatmul.mubr.bf16.gmra.mxu0 %v2081
        %v2172 = vpop.f32.mrf.mxu0
        %v2173 = vadd.f32 %v603, %v2172
        %v2174 = vpop.f32.mrf.mxu0
        %v2175 = vpop.f32.mrf.mxu0
        %v2176 = vadd.f32 %v603, %v2175
        %v2177 = vpop.f32.mrf.mxu0
        %2178 = vmatprep.mubr.bf16.mxu0 0
        %2179 = vmatmul.mubr.bf16.gmra.mxu0 %v2084
        %v2180 = vpop.f32.mrf.mxu0
        %v2181 = vadd.f32 %v603, %v2180
        %v2182 = vpop.f32.mrf.mxu0
        %v2183 = vpop.f32.mrf.mxu0
        %v2184 = vadd.f32 %v603, %v2183
        %v2185 = vpop.f32.mrf.mxu0
        %2186 = vmatprep.mubr.bf16.mxu0 0
        %2187 = vmatmul.mubr.bf16.gmra.mxu0 %v2087
        %v2188 = vpop.f32.mrf.mxu0
        %v2189 = vadd.f32 %v603, %v2188
        %v2190 = vpop.f32.mrf.mxu0
        %v2191 = vpop.f32.mrf.mxu0
        %v2192 = vadd.f32 %v603, %v2191
        %v2193 = vpop.f32.mrf.mxu0
        %2194 = vmatprep.mubr.bf16.mxu0 0
        %2195 = vmatmul.mubr.bf16.gmra.mxu0 %v2090
        %v2196 = vpop.f32.mrf.mxu0
        %v2197 = vadd.f32 %v603, %v2196
        %v2198 = vpop.f32.mrf.mxu0
        %v2199 = vpop.f32.mrf.mxu0
        %v2200 = vadd.f32 %v603, %v2199
        %v2201 = vpop.f32.mrf.mxu0
        %2202 = vmatprep.mubr.bf16.mxu0 0
        %2203 = vmatmul.mubr.bf16.gmra.mxu0 %v2093
        %v2204 = vpop.f32.mrf.mxu0
        %v2205 = vadd.f32 %v603, %v2204
        %v2206 = vpop.f32.mrf.mxu0
        %v2207 = vpop.f32.mrf.mxu0
        %v2208 = vadd.f32 %v603, %v2207
        %v2209 = vpop.f32.mrf.mxu0
        %2210 = vmatprep.mubr.bf16.mxu0 0
        %2211 = vmatmul.mubr.bf16.gmra.mxu0 %v2096
        %v2212 = vpop.f32.mrf.mxu0
        %v2213 = vadd.f32 %v603, %v2212
        %v2214 = vpop.f32.mrf.mxu0
        %v2215 = vpop.f32.mrf.mxu0
        %v2216 = vadd.f32 %v603, %v2215
        %v2217 = vpop.f32.mrf.mxu0
        %2218 = vdwg.mxu0
        %2219 = vmax.xlane.f32.xlu0 %v2157
        %v2220 = vpop.xlane.xlu0 %2219
        %2221 = vmax.xlane.f32.xlu0 %v2160
        %v2222 = vpop.xlane.xlu0 %2221
        %2223 = vmax.xlane.f32.xlu0 %v2165
        %v2224 = vpop.xlane.xlu0 %2223
        %2225 = vmax.xlane.f32.xlu0 %v2168
        %v2226 = vpop.xlane.xlu0 %2225
        %2227 = vmax.xlane.f32.xlu0 %v2173
        %v2228 = vpop.xlane.xlu0 %2227
        %2229 = vmax.xlane.f32.xlu0 %v2176
        %v2230 = vpop.xlane.xlu0 %2229
        %2231 = vmax.xlane.f32.xlu0 %v2181
        %v2232 = vpop.xlane.xlu0 %2231
        %2233 = vmax.xlane.f32.xlu0 %v2184
        %v2234 = vpop.xlane.xlu0 %2233
        %2235 = vmax.xlane.f32.xlu0 %v2189
        %v2236 = vpop.xlane.xlu0 %2235
        %2237 = vmax.xlane.f32.xlu0 %v2192
        %v2238 = vpop.xlane.xlu0 %2237
        %2239 = vmax.xlane.f32.xlu0 %v2197
        %v2240 = vpop.xlane.xlu0 %2239
        %2241 = vmax.xlane.f32.xlu0 %v2200
        %v2242 = vpop.xlane.xlu0 %2241
        %2243 = vmax.xlane.f32.xlu0 %v2205
        %v2244 = vpop.xlane.xlu0 %2243
        %2245 = vmax.xlane.f32.xlu0 %v2208
        %v2246 = vpop.xlane.xlu0 %2245
        %2247 = vmax.xlane.f32.xlu0 %v2213
        %v2248 = vpop.xlane.xlu0 %2247
        %2249 = vmax.xlane.f32.xlu0 %v2216
        %v2250 = vpop.xlane.xlu0 %2249
        %v2251 = vsub.f32 %v2157, %v2220
        %v2252 = vsub.f32 %v2160, %v2222
        %v2253 = vsub.f32 %v2165, %v2224
        %v2254 = vsub.f32 %v2168, %v2226
        %v2255 = vsub.f32 %v2173, %v2228
        %v2256 = vsub.f32 %v2176, %v2230
        %v2257 = vsub.f32 %v2181, %v2232
        %v2258 = vsub.f32 %v2184, %v2234
        %v2259 = vsub.f32 %v2189, %v2236
        %v2260 = vsub.f32 %v2192, %v2238
        %v2261 = vsub.f32 %v2197, %v2240
        %v2262 = vsub.f32 %v2200, %v2242
        %v2263 = vsub.f32 %v2205, %v2244
        %v2264 = vsub.f32 %v2208, %v2246
        %v2265 = vsub.f32 %v2213, %v2248
        %v2266 = vsub.f32 %v2216, %v2250
        %v2267 = vmul.f32 %v2251, 1.442695
        %v2268 = vpow.pop %v2267
        %v2269 = vmul.f32 %v2252, 1.442695
        %v2270 = vpow.pop %v2269
        %v2271 = vmul.f32 %v2253, 1.442695
        %v2272 = vpow.pop %v2271
        %v2273 = vmul.f32 %v2254, 1.442695
        %v2274 = vpow.pop %v2273
        %v2275 = vmul.f32 %v2255, 1.442695
        %v2276 = vpow.pop %v2275
        %v2277 = vmul.f32 %v2256, 1.442695
        %v2278 = vpow.pop %v2277
        %v2279 = vmul.f32 %v2257, 1.442695
        %v2280 = vpow.pop %v2279
        %v2281 = vmul.f32 %v2258, 1.442695
        %v2282 = vpow.pop %v2281
        %v2283 = vmul.f32 %v2259, 1.442695
        %v2284 = vpow.pop %v2283
        %v2285 = vmul.f32 %v2260, 1.442695
        %v2286 = vpow.pop %v2285
        %v2287 = vmul.f32 %v2261, 1.442695
        %v2288 = vpow.pop %v2287
        %v2289 = vmul.f32 %v2262, 1.442695
        %v2290 = vpow.pop %v2289
        %v2291 = vmul.f32 %v2263, 1.442695
        %v2292 = vpow.pop %v2291
        %v2293 = vmul.f32 %v2264, 1.442695
        %v2294 = vpow.pop %v2293
        %v2295 = vmul.f32 %v2265, 1.442695
        %v2296 = vpow.pop %v2295
        %v2297 = vmul.f32 %v2266, 1.442695
        %v2298 = vpow.pop %v2297
        %2299 = vadd.xlane.f32.xlu0 %v2268
        %v2300 = vpop.xlane.xlu0 %2299
        %2301 = vadd.xlane.f32.xlu0 %v2270
        %v2302 = vpop.xlane.xlu0 %2301
        %2303 = vadd.xlane.f32.xlu0 %v2272
        %v2304 = vpop.xlane.xlu0 %2303
        %2305 = vadd.xlane.f32.xlu0 %v2274
        %v2306 = vpop.xlane.xlu0 %2305
        %2307 = vadd.xlane.f32.xlu0 %v2276
        %v2308 = vpop.xlane.xlu0 %2307
        %2309 = vadd.xlane.f32.xlu0 %v2278
        %v2310 = vpop.xlane.xlu0 %2309
        %2311 = vadd.xlane.f32.xlu0 %v2280
        %v2312 = vpop.xlane.xlu0 %2311
        %2313 = vadd.xlane.f32.xlu0 %v2282
        %v2314 = vpop.xlane.xlu0 %2313
        %2315 = vadd.xlane.f32.xlu0 %v2284
        %v2316 = vpop.xlane.xlu0 %2315
        %2317 = vadd.xlane.f32.xlu0 %v2286
        %v2318 = vpop.xlane.xlu0 %2317
        %2319 = vadd.xlane.f32.xlu0 %v2288
        %v2320 = vpop.xlane.xlu0 %2319
        %2321 = vadd.xlane.f32.xlu0 %v2290
        %v2322 = vpop.xlane.xlu0 %2321
        %2323 = vadd.xlane.f32.xlu0 %v2292
        %v2324 = vpop.xlane.xlu0 %2323
        %2325 = vadd.xlane.f32.xlu0 %v2294
        %v2326 = vpop.xlane.xlu0 %2325
        %2327 = vadd.xlane.f32.xlu0 %v2296
        %v2328 = vpop.xlane.xlu0 %2327
        %2329 = vadd.xlane.f32.xlu0 %v2298
        %v2330 = vpop.xlane.xlu0 %2329
        %v2331 = vrcp.pop %v2300
        %v2332 = vrcp.pop %v2302
        %v2333 = vrcp.pop %v2304
        %v2334 = vrcp.pop %v2306
        %v2335 = vrcp.pop %v2308
        %v2336 = vrcp.pop %v2310
        %v2337 = vrcp.pop %v2312
        %v2338 = vrcp.pop %v2314
        %v2339 = vrcp.pop %v2316
        %v2340 = vrcp.pop %v2318
        %v2341 = vrcp.pop %v2320
        %v2342 = vrcp.pop %v2322
        %v2343 = vrcp.pop %v2324
        %v2344 = vrcp.pop %v2326
        %v2345 = vrcp.pop %v2328
        %v2346 = vrcp.pop %v2330
        %v2347 = vmul.f32 %v2268, %v2331
        %v2348 = vmul.f32 %v2270, %v2332
        %v2349 = vmul.f32 %v2272, %v2333
        %v2350 = vmul.f32 %v2274, %v2334
        %v2351 = vmul.f32 %v2276, %v2335
        %v2352 = vmul.f32 %v2278, %v2336
        %v2353 = vmul.f32 %v2280, %v2337
        %v2354 = vmul.f32 %v2282, %v2338
        %v2355 = vmul.f32 %v2284, %v2339
        %v2356 = vmul.f32 %v2286, %v2340
        %v2357 = vmul.f32 %v2288, %v2341
        %v2358 = vmul.f32 %v2290, %v2342
        %v2359 = vmul.f32 %v2292, %v2343
        %v2360 = vmul.f32 %v2294, %v2344
        %v2361 = vmul.f32 %v2296, %v2345
        %v2362 = vmul.f32 %v2298, %v2346
        %v2363 = vpack.c.bf16 %v2348, %v2347
        %v2364 = vpack.c.bf16 %v2350, %v2349
        %v2365 = vpack.c.bf16 %v2352, %v2351
        %v2366 = vpack.c.bf16 %v2354, %v2353
        %v2367 = vpack.c.bf16 %v2356, %v2355
        %v2368 = vpack.c.bf16 %v2358, %v2357
        %v2369 = vpack.c.bf16 %v2360, %v2359
        %v2370 = vpack.c.bf16 %v2362, %v2361
        %v2379 = vunpack.c.l.b16 %v2363
        %v2380 = vunpack.c.h.b16 %v2363
        %v2381 = vunpack.c.l.b16 %v2364
        %v2382 = vunpack.c.h.b16 %v2364
        %v2383 = vunpack.c.l.b16 %v2365
        %v2384 = vunpack.c.h.b16 %v2365
        %v2385 = vunpack.c.l.b16 %v2366
        %v2386 = vunpack.c.h.b16 %v2366
        %v2387 = vunpack.c.l.b16 %v2367
        %v2388 = vunpack.c.h.b16 %v2367
        %v2389 = vunpack.c.l.b16 %v2368
        %v2390 = vunpack.c.h.b16 %v2368
        %v2391 = vunpack.c.l.b16 %v2369
        %v2392 = vunpack.c.h.b16 %v2369
        %v2393 = vunpack.c.l.b16 %v2370
        %v2394 = vunpack.c.h.b16 %v2370
        %v2395 = vpack.c.b16 %v2379, %v2379
        %v2396 = vpack.c.b16 %v2380, %v2380
        %v2397 = vpack.c.b16 %v2381, %v2381
        %v2398 = vpack.c.b16 %v2382, %v2382
        %v2399 = vpack.c.b16 %v2383, %v2383
        %v2400 = vpack.c.b16 %v2384, %v2384
        %v2401 = vpack.c.b16 %v2385, %v2385
        %v2402 = vpack.c.b16 %v2386, %v2386
        %v2403 = vpack.c.b16 %v2387, %v2387
        %v2404 = vpack.c.b16 %v2388, %v2388
        %v2405 = vpack.c.b16 %v2389, %v2389
        %v2406 = vpack.c.b16 %v2390, %v2390
        %v2407 = vpack.c.b16 %v2391, %v2391
        %v2408 = vpack.c.b16 %v2392, %v2392
        %v2409 = vpack.c.b16 %v2393, %v2393
        %v2410 = vpack.c.b16 %v2394, %v2394
        %s2427 = scalar_lea.vmem %s212, 192 [#allocation4]
        %2428 = vst [vmem:[%s2427] sm:$0xf] %v2395
        %2429 = vst [vmem:[%s2427 + $0x4] sm:$0xf] %v2396
        %2430 = vst [vmem:[%s2427 + $0x8] sm:$0xf] %v2397
        %2431 = vst [vmem:[%s2427 + $0xc] sm:$0xf] %v2398
        %2432 = vst [vmem:[%s2427 + $0x10] sm:$0xf] %v2399
        %2433 = vst [vmem:[%s2427 + $0x14] sm:$0xf] %v2400
        %2434 = vst [vmem:[%s2427 + $0x18] sm:$0xf] %v2401
        %2435 = vst [vmem:[%s2427 + $0x1c] sm:$0xf] %v2402
        %2436 = vst [vmem:[%s2427 + $0x20] sm:$0xf] %v2403
        %2437 = vst [vmem:[%s2427 + $0x24] sm:$0xf] %v2404
        %2438 = vst [vmem:[%s2427 + $0x28] sm:$0xf] %v2405
        %2439 = vst [vmem:[%s2427 + $0x2c] sm:$0xf] %v2406
        %2440 = vst [vmem:[%s2427 + $0x30] sm:$0xf] %v2407
        %2441 = vst [vmem:[%s2427 + $0x34] sm:$0xf] %v2408
        %2442 = vst [vmem:[%s2427 + $0x38] sm:$0xf] %v2409
        %2443 = vst [vmem:[%s2427 + $0x3c] sm:$0xf] %v2410
        %s2444 = sand.u32 %s126, 1
        %s2445 = scalar_lea.sflag [#allocation5], %s2444
        %s2446 = sand.u32 %s126, 1
        %s2447 = smul.addr %s2446, 256
        %s2448 = scalar_lea.vmem [#allocation4], %s2447
        // Predicated region
        $region37: #{tpu_custom_call.1} parent=31 // pred_check
          %p2449 = pneg %p136
        $region38: #{tpu_custom_call.1} parent=31 // pred_check_branch
          %2451 = sbr.rel (%p2449) target = $region40
        $region39: #{tpu_custom_call.1} parent=31 // pred_region
          %s2452 = smul.u32 4, %s23
          %s2453 = smul.u32 16, %s24
          %s2455 = ssub.s32 4096, 4096
          %2456 = vsyncadd %s2445, %s2455
          %s2457 = smul.addr %s2452, 16
          %s2458 = sadd.s32 %s2453, %s2457
          %s2459 = smul.addr %s22, 64
          %s2460 = sadd.s32 %s2458, %s2459
          %s2461 = smul.addr %s2460, 64
          %s2462 = scalar_lea.hbm %s3, %s2461
          %s2463 = sshll.u32 %s2448, 4
          %s2464 = int_to_ptr.vmem [resolvable:$true] %s2463
          %2469 = dma.vmem_to_hbm [thread:$0]  %s2464, 4096, %s2462, %s2445, 64, 64, 4
        $region40: #{tpu_custom_call.1} parent=31 // pred_fallthru
          _
      $region32: #{tpu_custom_call.1} parent=5 // pred_fallthru
        _
      %p2470 = scmp.le.s32.totalorder 2, %s12
      // Predicated region
      $region41: #{tpu_custom_call.1} parent=5 // pred_check
        %p2471 = pneg %p2470
      $region42: #{tpu_custom_call.1} parent=5 // pred_check_branch
        %2473 = sbr.rel (%p2471) target = $region44
      $region43: #{tpu_custom_call.1} parent=5 // pred_region
        %s2474 = ssub.s32 %s12, 2
        // Predicated region
        $region45: #{tpu_custom_call.1} parent=43 // pred_check
          %p2475 = pneg %p142
        $region46: #{tpu_custom_call.1} parent=43 // pred_check_branch
          %2477 = sbr.rel (%p2475) target = $region48
        $region47: #{tpu_custom_call.1} parent=43 // pred_region
          %s2478 = sand.u32 %s127, 1
          %s2479 = scalar_lea.sflag [#allocation5], %s2478
          %s2480 = sand.u32 %s127, 1
          %s2481 = smul.addr %s2480, 256
          %s2482 = scalar_lea.vmem [#allocation4], %s2481
          %2483 = dma.done %s2479, 4096
        $region48: #{tpu_custom_call.1} parent=43 // pred_fallthru
          _
      $region44: #{tpu_custom_call.1} parent=5 // pred_fallthru
        _
    $region6: #{tpu_custom_call.1} parent=1 // loop_footer
      %s16 = sadd.s32 1, %s12
    $region7: #{tpu_custom_call.1} parent=1 // loop_footer_branch
      %11 = sbr.rel target = $region3
    $region8: #{tpu_custom_call.1} parent=1 // loop_exit
      _
    %2484 = vsyncpa [#allocation5], 1
    %s2485 = scalar_lea.sflag [#allocation5], 1
    %2486 = vsyncpa %s2485, 1

</llo_original>
